<compile_context>
chip_gen: v6e
topology: v6e:2x2x1
jax: 0.10.0
libtpu: 0.0.40
codegen_flags: <defaults>
</compile_context>

<pallas_src>
import functools
import math

import jax
import jax.numpy as jnp
from jax import lax
from jax.experimental import pallas as pl
from jax.experimental.pallas import tpu as pltpu


LN_EPS = 1e-5
_INV_SQRT2 = 1.0 / math.sqrt(2.0)


def _layer_norm(h, gamma, beta):
    mean = jnp.mean(h, axis=-1, keepdims=True)
    var = jnp.mean((h - mean) ** 2, axis=-1, keepdims=True)  # biased, like torch
    return (h - mean) * lax.rsqrt(var + LN_EPS) * gamma + beta


def encoder_layer_kernel(
    xq_ref, xkv_ref,
    wqkv_ref, bqkv_ref,
    wo_ref,
    w1_ref, b1_ref, w2_ref,
    vecs_ref,
    out_ref,
    *, num_heads, single_q_tile, matmul_dtype,
):
    f32 = jnp.float32
    xq = xq_ref[0].astype(f32)       # (TQ, D)  query tile (also the residual)
    xkv = xkv_ref[0].astype(f32)     # (S,  D)  full sequence for K/V
    TQ, D = xq.shape
    S = xkv.shape[0]
    H = num_heads
    hd = D // H
    scale = 1.0 / math.sqrt(hd)

    wqkv = wqkv_ref[...]                              # (D, 3D)
    bqkv = bqkv_ref[...].astype(f32)                  # (1, 3D)
    vecs = vecs_ref[...].astype(f32)                  # (6, D)
    bo = vecs[0:1, :]
    g1 = vecs[1:2, :]
    be1 = vecs[2:3, :]
    b2 = vecs[3:4, :]
    g2 = vecs[4:5, :]
    be2 = vecs[5:6, :]

    def mm(a, b):
        return jnp.dot(a.astype(matmul_dtype), b.astype(matmul_dtype),
                       preferred_element_type=f32)

    # ---- fused Q/K/V projection ------------------------------------------
    if single_q_tile:
        # one (S, D) x (D, 3D) matmul, then split
        qkv = mm(xkv, wqkv) + bqkv                    # (S, 3D)
        q = qkv[:, :D]
        k = qkv[:, D:2 * D]
        v = qkv[:, 2 * D:]
    else:
        # Q from the query tile; K|V (still fused) from the full sequence.
        q = mm(xq, wqkv[:, :D]) + bqkv[:, :D]         # (TQ, D)
        kv = mm(xkv, wqkv[:, D:]) + bqkv[:, D:]       # (S, 2D)
        k = kv[:, :D]
        v = kv[:, D:]

    # ---- batched multi-head attention -------------------------------------
    qh = jnp.swapaxes(q.reshape(TQ, H, hd), 0, 1)     # (H, TQ, hd)
    kh = jnp.swapaxes(k.reshape(S, H, hd), 0, 1)      # (H, S, hd)
    vh = jnp.swapaxes(v.reshape(S, H, hd), 0, 1)      # (H, S, hd)

    scores = jnp.einsum('hqd,hkd->hqk',
                        qh.astype(matmul_dtype), kh.astype(matmul_dtype),
                        preferred_element_type=f32) * scale     # (H, TQ, S)
    # TODO(synk): optional attention mask (forward default mask=None) is not
    # plumbed through; masked_fill path omitted.
    scores = scores - jnp.max(scores, axis=-1, keepdims=True)
    p = jnp.exp(scores)
    p = p * pl.reciprocal(jnp.sum(p, axis=-1, keepdims=True), approx=True)
    # TODO(synk): for very long S a flash-style online softmax over key blocks
    # would bound the live (TQ, S) score slab; not needed at these sizes.
    ctx = jnp.einsum('hqk,hkd->hqd',
                     p.astype(matmul_dtype), vh.astype(matmul_dtype),
                     preferred_element_type=f32)                 # (H, TQ, hd)
    attn = jnp.swapaxes(ctx, 0, 1).reshape(TQ, D)
    attn = mm(attn, wo_ref[...]) + bo

    # ---- residual + LayerNorm 1 (post-norm, like the PyTorch module) -------
    h1 = _layer_norm(xq + attn, g1, be1)

    # ---- position-wise FFN (exact erf GELU, same as torch F.gelu default) --
    f = mm(h1, w1_ref[...]) + b1_ref[...].astype(f32)
    f = 0.5 * f * (1.0 + lax.erf(f * _INV_SQRT2))
    f = mm(f, w2_ref[...]) + b2

    # ---- residual + LayerNorm 2 --------------------------------------------
    h2 = _layer_norm(h1 + f, g2, be2)

    out_ref[0] = h2.astype(out_ref.dtype)


def transformer_encoder_layer(x, params, *, num_heads, q_tile=None,
                              matmul_dtype=None):
    """x: (B, S, D). params: dict of weights (Linear weights are (in, out))."""
    B, S, D = x.shape
    assert D % num_heads == 0, "d_model must be divisible by num_heads"
    d_ff = params["w1"].shape[1]

    if matmul_dtype is None:
        matmul_dtype = x.dtype          # pass bf16 x/weights for v6e/v7x peak

    if q_tile is None:
        q_tile = S if S <= 512 else 512
    assert S % q_tile == 0 and (q_tile == S or q_tile % 8 == 0)
    n_qt = S // q_tile

    # ---- host-side packing: fused QKV weight/bias, packed (6, D) vectors ---
    wqkv = jnp.concatenate([params["wq"], params["wk"], params["wv"]], axis=1)
    bqkv = jnp.concatenate([params["bq"], params["bk"], params["bv"]], axis=1)
    vecs = jnp.concatenate([params["bo"], params["ln1_g"], params["ln1_b"],
                            params["b2"], params["ln2_g"], params["ln2_b"]],
                           axis=0)

    def const2d(shape):
        return pl.BlockSpec(shape, lambda b, t: (0, 0))

    in_specs = [
        pl.BlockSpec((1, q_tile, D), lambda b, t: (b, t, 0)),   # x (query tile)
        pl.BlockSpec((1, S, D), lambda b, t: (b, 0, 0)),        # x (keys/values)
        const2d((D, 3 * D)), const2d((1, 3 * D)),               # wqkv, bqkv
        const2d((D, D)),                                        # wo
        const2d((D, d_ff)), const2d((1, d_ff)),                 # w1, b1
        const2d((d_ff, D)),                                     # w2
        const2d((6, D)),                                        # bo/ln1/b2/ln2
    ]
    out_specs = pl.BlockSpec((1, q_tile, D), lambda b, t: (b, t, 0))

    # ---- advisory cost estimate --------------------------------------------
    flops = int(2 * B * S * (4 * D * D + 2 * D * d_ff) + 4 * B * S * S * D)
    transcendentals = int(B * num_heads * S * S + B * S * d_ff)
    w_itemsize = jnp.dtype(params["wq"].dtype).itemsize
    weight_bytes = w_itemsize * (4 * D * D + 2 * D * d_ff + 3 * D + d_ff + 6 * D)
    bytes_accessed = int(2 * B * S * D * jnp.dtype(x.dtype).itemsize
                         + weight_bytes)

    # ---- VMEM budget (double-buffered I/O + weights + f32 intermediates) ---
    x_itemsize = jnp.dtype(x.dtype).itemsize
    io_bytes = (2 * q_tile * D + S * D) * x_itemsize
    interm_bytes = 4 * (3 * S * D + 2 * num_heads * q_tile * S
                        + 2 * q_tile * d_ff + 6 * q_tile * D)
    vmem_est = int(1.5 * (2 * (weight_bytes + io_bytes) + interm_bytes))
    vmem_limit = min(max(vmem_est, 32 * 1024 * 1024), 64 * 1024 * 1024)

    kernel = functools.partial(
        encoder_layer_kernel,
        num_heads=num_heads,
        single_q_tile=(n_qt == 1),
        matmul_dtype=matmul_dtype,
    )

    return pl.pallas_call(
        kernel,
        out_shape=jax.ShapeDtypeStruct((B, S, D), x.dtype),
        grid_spec=pltpu.PrefetchScalarGridSpec(
            num_scalar_prefetch=0,
            grid=(B, n_qt),
            in_specs=in_specs,
            out_specs=out_specs,
        ),
        compiler_params=pltpu.CompilerParams(
            dimension_semantics=("parallel", "parallel"),
            vmem_limit_bytes=vmem_limit,
        ),
        cost_estimate=pl.CostEstimate(
            flops=flops,
            transcendentals=transcendentals,
            bytes_accessed=bytes_accessed,
        ),
    )(
        x, x,
        wqkv, bqkv,
        params["wo"],
        params["w1"], params["b1"], params["w2"],
        vecs,
    )


def init_params(key, d_model, d_ff, dtype=jnp.float32):
    keys = jax.random.split(key, 12)
    s = 0.02

    def lin(kw, shape):
        return (s * jax.random.normal(kw, shape, jnp.float32)).astype(dtype)

    return {
        # Linear weights stored as (in_features, out_features)
        "wq": lin(keys[0], (d_model, d_model)), "bq": lin(keys[1], (1, d_model)),
        "wk": lin(keys[2], (d_model, d_model)), "bk": lin(keys[3], (1, d_model)),
        "wv": lin(keys[4], (d_model, d_model)), "bv": lin(keys[5], (1, d_model)),
        "wo": lin(keys[6], (d_model, d_model)), "bo": lin(keys[7], (1, d_model)),
        "ln1_g": jnp.ones((1, d_model), dtype),
        "ln1_b": jnp.zeros((1, d_model), dtype),
        "w1": lin(keys[8], (d_model, d_ff)), "b1": lin(keys[9], (1, d_ff)),
        "w2": lin(keys[10], (d_ff, d_model)), "b2": lin(keys[11], (1, d_model)),
        "ln2_g": jnp.ones((1, d_model), dtype),
        "ln2_b": jnp.zeros((1, d_model), dtype),
    }


if __name__ == "__main__":
    B, S, D, H, D_FF = 2, 8, 32, 4, 64

    key = jax.random.PRNGKey(0)
    kx, kp = jax.random.split(key)
    x = jax.random.normal(kx, (B, S, D), jnp.float32)
    params = init_params(kp, D, D_FF)

    out = transformer_encoder_layer(x, params, num_heads=H)
    jax.block_until_ready(out)
    assert out.shape == (B, S, D)
    print("KERNEL_OK")
</pallas_src>

<mosaic_0001>
module attributes {stable_mosaic.version = 11 : i64} {
  func.func @encoder_layer_kernel(%arg0: i32, %arg1: i32, %arg2: memref<1x8x32xf32, #tpu.memory_space<vmem>>, %arg3: memref<1x8x32xf32, #tpu.memory_space<vmem>>, %arg4: memref<32x96xf32, #tpu.memory_space<vmem>>, %arg5: memref<1x96xf32, #tpu.memory_space<vmem>>, %arg6: memref<32x32xf32, #tpu.memory_space<vmem>>, %arg7: memref<32x64xf32, #tpu.memory_space<vmem>>, %arg8: memref<1x64xf32, #tpu.memory_space<vmem>>, %arg9: memref<64x32xf32, #tpu.memory_space<vmem>>, %arg10: memref<6x32xf32, #tpu.memory_space<vmem>>, %arg11: memref<1x8x32xf32, #tpu.memory_space<vmem>>) attributes {dimension_semantics = [#tpu.dimension_semantics<parallel>, #tpu.dimension_semantics<parallel>], iteration_bounds = array<i64: 2, 1>, scalar_prefetch = 0 : i64, scratch_operands = 0 : i64, tpu.core_type = #tpu.core_type<tc>, window_params = [{transform_indices = @transform_0, window_bounds = array<i64: 1, 8, 32>}, {transform_indices = @transform_1, window_bounds = array<i64: 1, 8, 32>}, {pipeline_mode = #tpu.pipeline_mode<synchronous>, transform_indices = @transform_2, window_bounds = array<i64: 32, 96>}, {pipeline_mode = #tpu.pipeline_mode<synchronous>, transform_indices = @transform_3, window_bounds = array<i64: 1, 96>}, {pipeline_mode = #tpu.pipeline_mode<synchronous>, transform_indices = @transform_4, window_bounds = array<i64: 32, 32>}, {pipeline_mode = #tpu.pipeline_mode<synchronous>, transform_indices = @transform_5, window_bounds = array<i64: 32, 64>}, {pipeline_mode = #tpu.pipeline_mode<synchronous>, transform_indices = @transform_6, window_bounds = array<i64: 1, 64>}, {pipeline_mode = #tpu.pipeline_mode<synchronous>, transform_indices = @transform_7, window_bounds = array<i64: 64, 32>}, {pipeline_mode = #tpu.pipeline_mode<synchronous>, transform_indices = @transform_8, window_bounds = array<i64: 6, 32>}, {transform_indices = @transform_9, window_bounds = array<i64: 1, 8, 32>}]} {
    %c0 = arith.constant 0 : index
    %c0_0 = arith.constant 0 : index
    %c0_1 = arith.constant 0 : index
    %0 = vector.load %arg2[%c0, %c0_0, %c0_1] : memref<1x8x32xf32, #tpu.memory_space<vmem>>, vector<1x8x32xf32>
    %1 = vector.shape_cast %0 : vector<1x8x32xf32> to vector<8x32xf32>
    %c0_2 = arith.constant 0 : index
    %c0_3 = arith.constant 0 : index
    %c0_4 = arith.constant 0 : index
    %2 = vector.load %arg3[%c0_2, %c0_3, %c0_4] : memref<1x8x32xf32, #tpu.memory_space<vmem>>, vector<1x8x32xf32>
    %3 = vector.shape_cast %2 : vector<1x8x32xf32> to vector<8x32xf32>
    %c0_5 = arith.constant 0 : index
    %c0_6 = arith.constant 0 : index
    %4 = vector.load %arg4[%c0_5, %c0_6] : memref<32x96xf32, #tpu.memory_space<vmem>>, vector<32x96xf32>
    %c0_7 = arith.constant 0 : index
    %c0_8 = arith.constant 0 : index
    %5 = vector.load %arg5[%c0_7, %c0_8] : memref<1x96xf32, #tpu.memory_space<vmem>>, vector<1x96xf32>
    %c0_9 = arith.constant 0 : index
    %c0_10 = arith.constant 0 : index
    %6 = vector.load %arg10[%c0_9, %c0_10] : memref<6x32xf32, #tpu.memory_space<vmem>>, vector<6x32xf32>
    %7 = vector.extract_strided_slice %6 {offsets = [0, 0], sizes = [1, 32], strides = [1, 1]} : vector<6x32xf32> to vector<1x32xf32>
    %8 = vector.extract_strided_slice %6 {offsets = [1, 0], sizes = [1, 32], strides = [1, 1]} : vector<6x32xf32> to vector<1x32xf32>
    %9 = vector.extract_strided_slice %6 {offsets = [2, 0], sizes = [1, 32], strides = [1, 1]} : vector<6x32xf32> to vector<1x32xf32>
    %10 = vector.extract_strided_slice %6 {offsets = [3, 0], sizes = [1, 32], strides = [1, 1]} : vector<6x32xf32> to vector<1x32xf32>
    %11 = vector.extract_strided_slice %6 {offsets = [4, 0], sizes = [1, 32], strides = [1, 1]} : vector<6x32xf32> to vector<1x32xf32>
    %12 = vector.extract_strided_slice %6 {offsets = [5, 0], sizes = [1, 32], strides = [1, 1]} : vector<6x32xf32> to vector<1x32xf32>
    %cst = arith.constant dense<0.000000e+00> : vector<8x96xf32>
    %13 = tpu.matmul %3, %4, %cst {dimension_numbers = #tpu.dot_dimension_numbers<[1], [0], [0], [1], [0, 0, 1, 1], [], []>} : vector<8x32xf32>, vector<32x96xf32>, vector<8x96xf32> -> vector<8x96xf32>
    %14 = vector.broadcast %5 : vector<1x96xf32> to vector<8x96xf32>
    %15 = arith.addf %13, %14 : vector<8x96xf32>
    %16 = vector.extract_strided_slice %15 {offsets = [0, 0], sizes = [8, 32], strides = [1, 1]} : vector<8x96xf32> to vector<8x32xf32>
    %17 = vector.extract_strided_slice %15 {offsets = [0, 32], sizes = [8, 32], strides = [1, 1]} : vector<8x96xf32> to vector<8x32xf32>
    %18 = vector.extract_strided_slice %15 {offsets = [0, 64], sizes = [8, 32], strides = [1, 1]} : vector<8x96xf32> to vector<8x32xf32>
    %19 = vector.shape_cast %16 : vector<8x32xf32> to vector<8x4x8xf32>
    %20 = tpu.transpose %19, [1, 0, 2] : vector<8x4x8xf32> -> vector<4x8x8xf32>
    %21 = vector.shape_cast %17 : vector<8x32xf32> to vector<8x4x8xf32>
    %22 = tpu.transpose %21, [1, 0, 2] : vector<8x4x8xf32> -> vector<4x8x8xf32>
    %23 = vector.shape_cast %18 : vector<8x32xf32> to vector<8x4x8xf32>
    %24 = tpu.transpose %23, [1, 0, 2] : vector<8x4x8xf32> -> vector<4x8x8xf32>
    "tpu.trace_start"() <{level = 10 : i32, message = "hqd,hkd->hqk"}> : () -> ()
    %cst_11 = arith.constant dense<0.000000e+00> : vector<4x8x8xf32>
    %25 = tpu.matmul %20, %22, %cst_11 {dimension_numbers = #tpu.dot_dimension_numbers<[2], [2], [1], [1], [0, 0, 0, 1, 1, 1], [0], [0]>} : vector<4x8x8xf32>, vector<4x8x8xf32>, vector<4x8x8xf32> -> vector<4x8x8xf32>
    "tpu.trace_stop"() : () -> ()
    %cst_12 = arith.constant 0.353553385 : f32
    %26 = vector.broadcast %cst_12 : f32 to vector<4x8x8xf32>
    %27 = arith.mulf %25, %26 : vector<4x8x8xf32>
    %cst_13 = arith.constant dense<0xFF800000> : vector<4x8xf32>
    %28 = vector.multi_reduction <maximumf>, %27, %cst_13 [2] : vector<4x8x8xf32> to vector<4x8xf32>
    %29 = vector.shape_cast %28 : vector<4x8xf32> to vector<4x8x1xf32>
    %30 = vector.broadcast %29 : vector<4x8x1xf32> to vector<4x8x8xf32>
    %31 = arith.subf %27, %30 : vector<4x8x8xf32>
    %32 = math.exp %31 : vector<4x8x8xf32>
    %cst_14 = arith.constant dense<0.000000e+00> : vector<4x8xf32>
    %33 = vector.multi_reduction <add>, %32, %cst_14 [2] : vector<4x8x8xf32> to vector<4x8xf32>
    %34 = vector.shape_cast %33 : vector<4x8xf32> to vector<4x8x1xf32>
    %35 = tpu.reciprocal %34 {approx = true} : vector<4x8x1xf32> -> vector<4x8x1xf32>
    %36 = vector.broadcast %35 : vector<4x8x1xf32> to vector<4x8x8xf32>
    %37 = arith.mulf %32, %36 : vector<4x8x8xf32>
    "tpu.trace_start"() <{level = 10 : i32, message = "hqk,hkd->hqd"}> : () -> ()
    %cst_15 = arith.constant dense<0.000000e+00> : vector<4x8x8xf32>
    %38 = tpu.matmul %37, %24, %cst_15 {dimension_numbers = #tpu.dot_dimension_numbers<[2], [1], [1], [2], [0, 0, 0, 1, 1, 2], [0], [0]>} : vector<4x8x8xf32>, vector<4x8x8xf32>, vector<4x8x8xf32> -> vector<4x8x8xf32>
    "tpu.trace_stop"() : () -> ()
    %39 = tpu.transpose %38, [1, 0, 2] : vector<4x8x8xf32> -> vector<8x4x8xf32>
    %40 = vector.shape_cast %39 : vector<8x4x8xf32> to vector<8x32xf32>
    %c0_16 = arith.constant 0 : index
    %c0_17 = arith.constant 0 : index
    %41 = vector.load %arg6[%c0_16, %c0_17] : memref<32x32xf32, #tpu.memory_space<vmem>>, vector<32x32xf32>
    %cst_18 = arith.constant dense<0.000000e+00> : vector<8x32xf32>
    %42 = tpu.matmul %40, %41, %cst_18 {dimension_numbers = #tpu.dot_dimension_numbers<[1], [0], [0], [1], [0, 0, 1, 1], [], []>} : vector<8x32xf32>, vector<32x32xf32>, vector<8x32xf32> -> vector<8x32xf32>
    %43 = vector.broadcast %7 : vector<1x32xf32> to vector<8x32xf32>
    %44 = arith.addf %42, %43 : vector<8x32xf32>
    %45 = arith.addf %1, %44 : vector<8x32xf32>
    %cst_19 = arith.constant dense<0.000000e+00> : vector<8xf32>
    %46 = vector.multi_reduction <add>, %45, %cst_19 [1] : vector<8x32xf32> to vector<8xf32>
    %47 = vector.shape_cast %46 : vector<8xf32> to vector<8x1xf32>
    %cst_20 = arith.constant 3.200000e+01 : f32
    %48 = vector.broadcast %cst_20 : f32 to vector<8x1xf32>
    %49 = arith.divf %47, %48 : vector<8x1xf32>
    %50 = vector.broadcast %49 : vector<8x1xf32> to vector<8x32xf32>
    %51 = arith.subf %45, %50 : vector<8x32xf32>
    %52 = arith.mulf %51, %51 : vector<8x32xf32>
    %cst_21 = arith.constant dense<0.000000e+00> : vector<8xf32>
    %53 = vector.multi_reduction <add>, %52, %cst_21 [1] : vector<8x32xf32> to vector<8xf32>
    %54 = vector.shape_cast %53 : vector<8xf32> to vector<8x1xf32>
    %cst_22 = arith.constant 3.200000e+01 : f32
    %55 = vector.broadcast %cst_22 : f32 to vector<8x1xf32>
    %56 = arith.divf %54, %55 : vector<8x1xf32>
    %57 = vector.broadcast %49 : vector<8x1xf32> to vector<8x32xf32>
    %58 = arith.subf %45, %57 : vector<8x32xf32>
    %cst_23 = arith.constant 9.99999974E-6 : f32
    %59 = vector.broadcast %cst_23 : f32 to vector<8x1xf32>
    %60 = arith.addf %56, %59 : vector<8x1xf32>
    %61 = math.rsqrt %60 : vector<8x1xf32>
    %62 = vector.broadcast %61 : vector<8x1xf32> to vector<8x32xf32>
    %63 = arith.mulf %58, %62 : vector<8x32xf32>
    %64 = vector.broadcast %8 : vector<1x32xf32> to vector<8x32xf32>
    %65 = arith.mulf %63, %64 : vector<8x32xf32>
    %66 = vector.broadcast %9 : vector<1x32xf32> to vector<8x32xf32>
    %67 = arith.addf %65, %66 : vector<8x32xf32>
    %c0_24 = arith.constant 0 : index
    %c0_25 = arith.constant 0 : index
    %68 = vector.load %arg7[%c0_24, %c0_25] : memref<32x64xf32, #tpu.memory_space<vmem>>, vector<32x64xf32>
    %cst_26 = arith.constant dense<0.000000e+00> : vector<8x64xf32>
    %69 = tpu.matmul %67, %68, %cst_26 {dimension_numbers = #tpu.dot_dimension_numbers<[1], [0], [0], [1], [0, 0, 1, 1], [], []>} : vector<8x32xf32>, vector<32x64xf32>, vector<8x64xf32> -> vector<8x64xf32>
    %c0_27 = arith.constant 0 : index
    %c0_28 = arith.constant 0 : index
    %70 = vector.load %arg8[%c0_27, %c0_28] : memref<1x64xf32, #tpu.memory_space<vmem>>, vector<1x64xf32>
    %71 = vector.broadcast %70 : vector<1x64xf32> to vector<8x64xf32>
    %72 = arith.addf %69, %71 : vector<8x64xf32>
    %cst_29 = arith.constant 5.000000e-01 : f32
    %73 = vector.broadcast %cst_29 : f32 to vector<8x64xf32>
    %74 = arith.mulf %73, %72 : vector<8x64xf32>
    %cst_30 = arith.constant 0.707106769 : f32
    %75 = vector.broadcast %cst_30 : f32 to vector<8x64xf32>
    %76 = arith.mulf %72, %75 : vector<8x64xf32>
    %77 = math.erf %76 : vector<8x64xf32>
    %cst_31 = arith.constant 1.000000e+00 : f32
    %78 = vector.broadcast %cst_31 : f32 to vector<8x64xf32>
    %79 = arith.addf %78, %77 : vector<8x64xf32>
    %80 = arith.mulf %74, %79 : vector<8x64xf32>
    %c0_32 = arith.constant 0 : index
    %c0_33 = arith.constant 0 : index
    %81 = vector.load %arg9[%c0_32, %c0_33] : memref<64x32xf32, #tpu.memory_space<vmem>>, vector<64x32xf32>
    %cst_34 = arith.constant dense<0.000000e+00> : vector<8x32xf32>
    %82 = tpu.matmul %80, %81, %cst_34 {dimension_numbers = #tpu.dot_dimension_numbers<[1], [0], [0], [1], [0, 0, 1, 1], [], []>} : vector<8x64xf32>, vector<64x32xf32>, vector<8x32xf32> -> vector<8x32xf32>
    %83 = vector.broadcast %10 : vector<1x32xf32> to vector<8x32xf32>
    %84 = arith.addf %82, %83 : vector<8x32xf32>
    %85 = arith.addf %67, %84 : vector<8x32xf32>
    %cst_35 = arith.constant dense<0.000000e+00> : vector<8xf32>
    %86 = vector.multi_reduction <add>, %85, %cst_35 [1] : vector<8x32xf32> to vector<8xf32>
    %87 = vector.shape_cast %86 : vector<8xf32> to vector<8x1xf32>
    %cst_36 = arith.constant 3.200000e+01 : f32
    %88 = vector.broadcast %cst_36 : f32 to vector<8x1xf32>
    %89 = arith.divf %87, %88 : vector<8x1xf32>
    %90 = vector.broadcast %89 : vector<8x1xf32> to vector<8x32xf32>
    %91 = arith.subf %85, %90 : vector<8x32xf32>
    %92 = arith.mulf %91, %91 : vector<8x32xf32>
    %cst_37 = arith.constant dense<0.000000e+00> : vector<8xf32>
    %93 = vector.multi_reduction <add>, %92, %cst_37 [1] : vector<8x32xf32> to vector<8xf32>
    %94 = vector.shape_cast %93 : vector<8xf32> to vector<8x1xf32>
    %cst_38 = arith.constant 3.200000e+01 : f32
    %95 = vector.broadcast %cst_38 : f32 to vector<8x1xf32>
    %96 = arith.divf %94, %95 : vector<8x1xf32>
    %97 = vector.broadcast %89 : vector<8x1xf32> to vector<8x32xf32>
    %98 = arith.subf %85, %97 : vector<8x32xf32>
    %cst_39 = arith.constant 9.99999974E-6 : f32
    %99 = vector.broadcast %cst_39 : f32 to vector<8x1xf32>
    %100 = arith.addf %96, %99 : vector<8x1xf32>
    %101 = math.rsqrt %100 : vector<8x1xf32>
    %102 = vector.broadcast %101 : vector<8x1xf32> to vector<8x32xf32>
    %103 = arith.mulf %98, %102 : vector<8x32xf32>
    %104 = vector.broadcast %11 : vector<1x32xf32> to vector<8x32xf32>
    %105 = arith.mulf %103, %104 : vector<8x32xf32>
    %106 = vector.broadcast %12 : vector<1x32xf32> to vector<8x32xf32>
    %107 = arith.addf %105, %106 : vector<8x32xf32>
    %c0_40 = arith.constant 0 : index
    %c0_41 = arith.constant 0 : index
    %c0_42 = arith.constant 0 : index
    %108 = vector.load %arg11[%c0_40, %c0_41, %c0_42] : memref<1x8x32xf32, #tpu.memory_space<vmem>>, vector<1x8x32xf32>
    %109 = vector.shape_cast %108 : vector<1x8x32xf32> to vector<8x32xf32>
    %110 = vector.shape_cast %107 : vector<8x32xf32> to vector<1x8x32xf32>
    tpu.vector_store %arg11[%c0_40, %c0_41, %c0_42], %110 {strides = array<i32>} : memref<1x8x32xf32, #tpu.memory_space<vmem>>, vector<1x8x32xf32>,
    return
  }
  func.func @transform_0(%arg0: i32, %arg1: i32) -> (i32, i32, i32) {
    %c0_i32 = arith.constant 0 : i32
    %c0_i32_0 = arith.constant 0 : i32
    return %arg0, %arg1, %c0_i32 : i32, i32, i32
  }
  func.func @transform_1(%arg0: i32, %arg1: i32) -> (i32, i32, i32) {
    %c0_i32 = arith.constant 0 : i32
    %c0_i32_0 = arith.constant 0 : i32
    %c0_i32_1 = arith.constant 0 : i32
    return %arg0, %c0_i32, %c0_i32_0 : i32, i32, i32
  }
  func.func @transform_2(%arg0: i32, %arg1: i32) -> (i32, i32) {
    %c0_i32 = arith.constant 0 : i32
    %c0_i32_0 = arith.constant 0 : i32
    %c0_i32_1 = arith.constant 0 : i32
    return %c0_i32, %c0_i32_0 : i32, i32
  }
  func.func @transform_3(%arg0: i32, %arg1: i32) -> (i32, i32) {
    %c0_i32 = arith.constant 0 : i32
    %c0_i32_0 = arith.constant 0 : i32
    %c0_i32_1 = arith.constant 0 : i32
    return %c0_i32, %c0_i32_0 : i32, i32
  }
  func.func @transform_4(%arg0: i32, %arg1: i32) -> (i32, i32) {
    %c0_i32 = arith.constant 0 : i32
    %c0_i32_0 = arith.constant 0 : i32
    %c0_i32_1 = arith.constant 0 : i32
    return %c0_i32, %c0_i32_0 : i32, i32
  }
  func.func @transform_5(%arg0: i32, %arg1: i32) -> (i32, i32) {
    %c0_i32 = arith.constant 0 : i32
    %c0_i32_0 = arith.constant 0 : i32
    %c0_i32_1 = arith.constant 0 : i32
    return %c0_i32, %c0_i32_0 : i32, i32
  }
  func.func @transform_6(%arg0: i32, %arg1: i32) -> (i32, i32) {
    %c0_i32 = arith.constant 0 : i32
    %c0_i32_0 = arith.constant 0 : i32
    %c0_i32_1 = arith.constant 0 : i32
    return %c0_i32, %c0_i32_0 : i32, i32
  }
  func.func @transform_7(%arg0: i32, %arg1: i32) -> (i32, i32) {
    %c0_i32 = arith.constant 0 : i32
    %c0_i32_0 = arith.constant 0 : i32
    %c0_i32_1 = arith.constant 0 : i32
    return %c0_i32, %c0_i32_0 : i32, i32
  }
  func.func @transform_8(%arg0: i32, %arg1: i32) -> (i32, i32) {
    %c0_i32 = arith.constant 0 : i32
    %c0_i32_0 = arith.constant 0 : i32
    %c0_i32_1 = arith.constant 0 : i32
    return %c0_i32, %c0_i32_0 : i32, i32
  }
  func.func @transform_9(%arg0: i32, %arg1: i32) -> (i32, i32, i32) {
    %c0_i32 = arith.constant 0 : i32
    %c0_i32_0 = arith.constant 0 : i32
    return %arg0, %arg1, %c0_i32 : i32, i32, i32
  }
}

</mosaic_0001>

<llo_original>
// kernel: tpu_custom_call.1
$region0: #{tpu_custom_call.1}
  #allocation0 [shape = 'u32[]', space=smem, size = 0x4, offset = 0x4, fixed_abs, tag = 'smem constant byte address 0x4 - core index']
  #allocation1 [shape = 'u32[144,128]{1,0:T(1,128)}', space=vmem, size = 0x12000, scoped, tag = 'internal scratch']
  %s0 = inlined_call_operand.hbm [shape: f32[2,8,32], index: 0, kind: input, shape index: {}]
  %s1 = inlined_call_operand.hbm [shape: f32[2,8,32], index: 1, kind: input, shape index: {}]
  %s2 = inlined_call_operand.vmem [shape: f32[32,96], index: 2, kind: input, shape index: {}]
  %s3 = inlined_call_operand.vmem [shape: f32[1,96], index: 3, kind: input, shape index: {}]
  %s4 = inlined_call_operand.vmem [shape: f32[32,32], index: 4, kind: input, shape index: {}]
  %s5 = inlined_call_operand.vmem [shape: f32[32,64], index: 5, kind: input, shape index: {}]
  %s6 = inlined_call_operand.vmem [shape: f32[1,64], index: 6, kind: input, shape index: {}]
  %s7 = inlined_call_operand.vmem [shape: f32[64,32], index: 7, kind: input, shape index: {}]
  %s8 = inlined_call_operand.vmem [shape: f32[6,32], index: 8, kind: input, shape index: {}]
  %s9 = inlined_call_operand.hbm [shape: f32[2,8,32], index: 9, kind: output, shape index: {}]
  %s10 = sld [smem:[#allocation0]]
  $region77: #{tpu_custom_call.1} parent=0
    _
  %s12 = ssub.s32 1, %s10
  %s13 = scalar_select 0, %s12, %s10
  $region1: #{tpu_custom_call.1} parent=0
    #allocation2 [shape = 'u8[8192]{0}', space=vmem, size = 0x2000, scoped, tag = 'input window, operand 0']
    #allocation3 [shape = 's32[2]{0}', space=sflag, size = 0x8, scoped, tag = 'scoped memory for tpu_custom_call.1']
    #allocation4 [shape = 's32[2]{0}', space=sflag, size = 0x8, scoped, tag = 'scoped memory for tpu_custom_call.1']
    #allocation5 [shape = 'u8[8192]{0}', space=vmem, size = 0x2000, scoped, tag = 'input window, operand 1']
    #allocation6 [shape = 's32[2]{0}', space=sflag, size = 0x8, scoped, tag = 'scoped memory for tpu_custom_call.1']
    #allocation7 [shape = 'u8[8192]{0}', space=vmem, size = 0x2000, scoped, tag = 'output window, operand 0']
    %14 = vsyncpa [#allocation3], 0
    %s15 = scalar_lea.sflag [#allocation3], 1
    %16 = vsyncpa %s15, 0
    %17 = vsyncpa [#allocation6], 0
    %s18 = scalar_lea.sflag [#allocation6], 1
    %19 = vsyncpa %s18, 0
    %20 = vsyncpa [#allocation4], 0
    %s21 = scalar_lea.sflag [#allocation4], 1
    %22 = vsyncpa %s21, 0
    loop: start=0, step=1, limit=4
    $region2: #{tpu_custom_call.1} parent=1 // loop_pre_header
      _
    $region3: #{tpu_custom_call.1} parent=1 // loop_header
      %s24 = sphi 0, %s28
      %p25 = scmp.ge.s32.totalorder %s24, 4
      %s31 = sphi 0, %s43
      %s32 = sphi 0, %s39
      %s33 = sphi 0, %s31
      %s34 = sphi 0, %s32
      %s35 = sphi 0, %s33
      %s36 = sphi 0, %s34
      %s48 = sphi 0, %s50
      %s51 = sphi 0, %s48
      %s52 = sphi 0, %s51
      %s68 = sphi 0, %s52
      %s74 = sphi 0, %s76
      %s77 = sphi 0, %s74
      %s78 = sphi 0, %s77
      %s94 = sphi 0, %s78
      %s98 = sphi 0, %s98
      %s100 = sphi 0, %s98
      %s101 = sphi 0, %s100
      %s115 = sphi 0, %s101
      %s119 = sphi 0, %s119
      %s121 = sphi 0, %s119
      %s122 = sphi 0, %s121
      %s136 = sphi 0, %s122
      %s140 = sphi 0, %s140
      %s142 = sphi 0, %s140
      %s143 = sphi 0, %s142
      %s157 = sphi 0, %s143
      %s161 = sphi 0, %s161
      %s163 = sphi 0, %s161
      %s164 = sphi 0, %s163
      %s178 = sphi 0, %s164
      %s182 = sphi 0, %s182
      %s184 = sphi 0, %s182
      %s185 = sphi 0, %s184
      %s199 = sphi 0, %s185
      %s203 = sphi 0, %s203
      %s205 = sphi 0, %s203
      %s206 = sphi 0, %s205
      %s220 = sphi 0, %s206
      %s224 = sphi 0, %s224
      %s226 = sphi 0, %s224
      %s227 = sphi 0, %s226
      %s241 = sphi 0, %s227
      %s249 = sphi 0, %s251
      %s252 = sphi 0, %s249
      %s253 = sphi 0, %s252
      %s269 = sphi 0, %s253
    $region4: #{tpu_custom_call.1} parent=1 // loop_header_branch
      %27 = sbr.rel (%p25) target = $region8
    $region5: #{tpu_custom_call.1} parent=1 // loop_body
      %s29 = ssub.s32 %s24, 1
      %s30 = ssub.s32 %s24, 2
      %s37 = sadd.s32 1, %s32
      %p38 = scmp.ge.s32.totalorder %s37, 1
      %s39 = scalar_select %p38, 0, %s37
      %s40 = sadd.s32 1, %s31
      %s41 = scalar_select %p38, %s40, %s31
      %p42 = scmp.ge.s32.totalorder %s41, 2
      %s43 = scalar_select %p42, 0, %s41
      %s44 = ssub.s32 %s31, %s43
      %s45 = ssub.s32 %s32, %s39
      %s46 = sor.u32 %s44, %s45
      %p47 = scmp.eq.s32.totalorder %s46, 0
      %s49 = sadd.s32 %s48, 1
      %s50 = scalar_select %p47, %s48, %s49
      %p53 = pneg %p47
      %p54 = scmp.eq.s32.totalorder %s24, 1
      %p55 = por %p53, %p54
      %p56 = scmp.ne.s32.totalorder %s48, %s51
      %p57 = scmp.eq.s32.totalorder %s24, 0
      %p58 = por %p56, %p57
      %p59 = scmp.ne.s32.totalorder %s48, %s51
      %p60 = scmp.eq.s32.totalorder %s29, 1
      %p61 = por %p59, %p60
      %p62 = scmp.ne.s32.totalorder %s51, %s52
      %p63 = scmp.eq.s32.totalorder %s29, 0
      %p64 = por %p62, %p63
      %p65 = scmp.ne.s32.totalorder %s51, %s52
      %p66 = scmp.eq.s32.totalorder %s30, 1
      %p67 = por %p65, %p66
      %p69 = scmp.ne.s32.totalorder %s52, %s68
      %p70 = scmp.eq.s32.totalorder %s30, 0
      %p71 = por %p69, %p70
      %s72 = ssub.s32 %s31, %s43
      %p73 = scmp.eq.s32.totalorder %s72, 0
      %s75 = sadd.s32 %s74, 1
      %s76 = scalar_select %p73, %s74, %s75
      %p79 = pneg %p73
      %p80 = scmp.eq.s32.totalorder %s24, 1
      %p81 = por %p79, %p80
      %p82 = scmp.ne.s32.totalorder %s74, %s77
      %p83 = scmp.eq.s32.totalorder %s24, 0
      %p84 = por %p82, %p83
      %p85 = scmp.ne.s32.totalorder %s74, %s77
      %p86 = scmp.eq.s32.totalorder %s29, 1
      %p87 = por %p85, %p86
      %p88 = scmp.ne.s32.totalorder %s77, %s78
      %p89 = scmp.eq.s32.totalorder %s29, 0
      %p90 = por %p88, %p89
      %p91 = scmp.ne.s32.totalorder %s77, %s78
      %p92 = scmp.eq.s32.totalorder %s30, 1
      %p93 = por %p91, %p92
      %p95 = scmp.ne.s32.totalorder %s78, %s94
      %p96 = scmp.eq.s32.totalorder %s30, 0
      %p97 = por %p95, %p96
      %s99 = sadd.s32 %s98, 1
      %p102 = scmp.eq.s32.totalorder %s24, 1
      %p103 = scmp.ne.s32.totalorder %s98, %s100
      %p104 = scmp.eq.s32.totalorder %s24, 0
      %p105 = por %p103, %p104
      %p106 = scmp.ne.s32.totalorder %s98, %s100
      %p107 = scmp.eq.s32.totalorder %s29, 1
      %p108 = por %p106, %p107
      %p109 = scmp.ne.s32.totalorder %s100, %s101
      %p110 = scmp.eq.s32.totalorder %s29, 0
      %p111 = por %p109, %p110
      %p112 = scmp.ne.s32.totalorder %s100, %s101
      %p113 = scmp.eq.s32.totalorder %s30, 1
      %p114 = por %p112, %p113
      %p116 = scmp.ne.s32.totalorder %s101, %s115
      %p117 = scmp.eq.s32.totalorder %s30, 0
      %p118 = por %p116, %p117
      %s120 = sadd.s32 %s119, 1
      %p123 = scmp.eq.s32.totalorder %s24, 1
      %p124 = scmp.ne.s32.totalorder %s119, %s121
      %p125 = scmp.eq.s32.totalorder %s24, 0
      %p126 = por %p124, %p125
      %p127 = scmp.ne.s32.totalorder %s119, %s121
      %p128 = scmp.eq.s32.totalorder %s29, 1
      %p129 = por %p127, %p128
      %p130 = scmp.ne.s32.totalorder %s121, %s122
      %p131 = scmp.eq.s32.totalorder %s29, 0
      %p132 = por %p130, %p131
      %p133 = scmp.ne.s32.totalorder %s121, %s122
      %p134 = scmp.eq.s32.totalorder %s30, 1
      %p135 = por %p133, %p134
      %p137 = scmp.ne.s32.totalorder %s122, %s136
      %p138 = scmp.eq.s32.totalorder %s30, 0
      %p139 = por %p137, %p138
      %s141 = sadd.s32 %s140, 1
      %p144 = scmp.eq.s32.totalorder %s24, 1
      %p145 = scmp.ne.s32.totalorder %s140, %s142
      %p146 = scmp.eq.s32.totalorder %s24, 0
      %p147 = por %p145, %p146
      %p148 = scmp.ne.s32.totalorder %s140, %s142
      %p149 = scmp.eq.s32.totalorder %s29, 1
      %p150 = por %p148, %p149
      %p151 = scmp.ne.s32.totalorder %s142, %s143
      %p152 = scmp.eq.s32.totalorder %s29, 0
      %p153 = por %p151, %p152
      %p154 = scmp.ne.s32.totalorder %s142, %s143
      %p155 = scmp.eq.s32.totalorder %s30, 1
      %p156 = por %p154, %p155
      %p158 = scmp.ne.s32.totalorder %s143, %s157
      %p159 = scmp.eq.s32.totalorder %s30, 0
      %p160 = por %p158, %p159
      %s162 = sadd.s32 %s161, 1
      %p165 = scmp.eq.s32.totalorder %s24, 1
      %p166 = scmp.ne.s32.totalorder %s161, %s163
      %p167 = scmp.eq.s32.totalorder %s24, 0
      %p168 = por %p166, %p167
      %p169 = scmp.ne.s32.totalorder %s161, %s163
      %p170 = scmp.eq.s32.totalorder %s29, 1
      %p171 = por %p169, %p170
      %p172 = scmp.ne.s32.totalorder %s163, %s164
      %p173 = scmp.eq.s32.totalorder %s29, 0
      %p174 = por %p172, %p173
      %p175 = scmp.ne.s32.totalorder %s163, %s164
      %p176 = scmp.eq.s32.totalorder %s30, 1
      %p177 = por %p175, %p176
      %p179 = scmp.ne.s32.totalorder %s164, %s178
      %p180 = scmp.eq.s32.totalorder %s30, 0
      %p181 = por %p179, %p180
      %s183 = sadd.s32 %s182, 1
      %p186 = scmp.eq.s32.totalorder %s24, 1
      %p187 = scmp.ne.s32.totalorder %s182, %s184
      %p188 = scmp.eq.s32.totalorder %s24, 0
      %p189 = por %p187, %p188
      %p190 = scmp.ne.s32.totalorder %s182, %s184
      %p191 = scmp.eq.s32.totalorder %s29, 1
      %p192 = por %p190, %p191
      %p193 = scmp.ne.s32.totalorder %s184, %s185
      %p194 = scmp.eq.s32.totalorder %s29, 0
      %p195 = por %p193, %p194
      %p196 = scmp.ne.s32.totalorder %s184, %s185
      %p197 = scmp.eq.s32.totalorder %s30, 1
      %p198 = por %p196, %p197
      %p200 = scmp.ne.s32.totalorder %s185, %s199
      %p201 = scmp.eq.s32.totalorder %s30, 0
      %p202 = por %p200, %p201
      %s204 = sadd.s32 %s203, 1
      %p207 = scmp.eq.s32.totalorder %s24, 1
      %p208 = scmp.ne.s32.totalorder %s203, %s205
      %p209 = scmp.eq.s32.totalorder %s24, 0
      %p210 = por %p208, %p209
      %p211 = scmp.ne.s32.totalorder %s203, %s205
      %p212 = scmp.eq.s32.totalorder %s29, 1
      %p213 = por %p211, %p212
      %p214 = scmp.ne.s32.totalorder %s205, %s206
      %p215 = scmp.eq.s32.totalorder %s29, 0
      %p216 = por %p214, %p215
      %p217 = scmp.ne.s32.totalorder %s205, %s206
      %p218 = scmp.eq.s32.totalorder %s30, 1
      %p219 = por %p217, %p218
      %p221 = scmp.ne.s32.totalorder %s206, %s220
      %p222 = scmp.eq.s32.totalorder %s30, 0
      %p223 = por %p221, %p222
      %s225 = sadd.s32 %s224, 1
      %p228 = scmp.eq.s32.totalorder %s24, 1
      %p229 = scmp.ne.s32.totalorder %s224, %s226
      %p230 = scmp.eq.s32.totalorder %s24, 0
      %p231 = por %p229, %p230
      %p232 = scmp.ne.s32.totalorder %s224, %s226
      %p233 = scmp.eq.s32.totalorder %s29, 1
      %p234 = por %p232, %p233
      %p235 = scmp.ne.s32.totalorder %s226, %s227
      %p236 = scmp.eq.s32.totalorder %s29, 0
      %p237 = por %p235, %p236
      %p238 = scmp.ne.s32.totalorder %s226, %s227
      %p239 = scmp.eq.s32.totalorder %s30, 1
      %p240 = por %p238, %p239
      %p242 = scmp.ne.s32.totalorder %s227, %s241
      %p243 = scmp.eq.s32.totalorder %s30, 0
      %p244 = por %p242, %p243
      %s245 = ssub.s32 %s31, %s43
      %s246 = ssub.s32 %s32, %s39
      %s247 = sor.u32 %s245, %s246
      %p248 = scmp.eq.s32.totalorder %s247, 0
      %s250 = sadd.s32 %s249, 1
      %s251 = scalar_select %p248, %s249, %s250
      %p254 = pneg %p248
      %p255 = scmp.eq.s32.totalorder %s24, 1
      %p256 = por %p254, %p255
      %p257 = scmp.ne.s32.totalorder %s249, %s252
      %p258 = scmp.eq.s32.totalorder %s24, 0
      %p259 = por %p257, %p258
      %p260 = scmp.ne.s32.totalorder %s249, %s252
      %p261 = scmp.eq.s32.totalorder %s29, 1
      %p262 = por %p260, %p261
      %p263 = scmp.ne.s32.totalorder %s252, %s253
      %p264 = scmp.eq.s32.totalorder %s29, 0
      %p265 = por %p263, %p264
      %p266 = scmp.ne.s32.totalorder %s252, %s253
      %p267 = scmp.eq.s32.totalorder %s30, 1
      %p268 = por %p266, %p267
      %p270 = scmp.ne.s32.totalorder %s253, %s269
      %p271 = scmp.eq.s32.totalorder %s30, 0
      %p272 = por %p270, %p271
      %p273 = scmp.le.s32.totalorder 1, %s24
      %p274 = scmp.lt.s32.totalorder %s24, 3
      %p275 = pnand %p273, %p274
      %p276 = pneg %p275
      // Predicated region
      $region9: #{tpu_custom_call.1} parent=5 // pred_check
        _
      $region10: #{tpu_custom_call.1} parent=5 // pred_check_branch
        %278 = sbr.rel (%p275) target = $region12
      $region11: #{tpu_custom_call.1} parent=5 // pred_region
        %s279 = ssub.s32 %s24, 1
        // Predicated region
        $region13: #{tpu_custom_call.1} parent=11 // pred_check
          %p280 = pneg %p111
        $region14: #{tpu_custom_call.1} parent=11 // pred_check_branch
          %282 = sbr.rel (%p280) target = $region16
        $region15: #{tpu_custom_call.1} parent=11 // pred_region
          _
        $region16: #{tpu_custom_call.1} parent=11 // pred_fallthru
          _
        // Predicated region
        $region17: #{tpu_custom_call.1} parent=11 // pred_check
          %p283 = pneg %p132
        $region18: #{tpu_custom_call.1} parent=11 // pred_check_branch
          %285 = sbr.rel (%p283) target = $region20
        $region19: #{tpu_custom_call.1} parent=11 // pred_region
          _
        $region20: #{tpu_custom_call.1} parent=11 // pred_fallthru
          _
        // Predicated region
        $region21: #{tpu_custom_call.1} parent=11 // pred_check
          %p286 = pneg %p153
        $region22: #{tpu_custom_call.1} parent=11 // pred_check_branch
          %288 = sbr.rel (%p286) target = $region24
        $region23: #{tpu_custom_call.1} parent=11 // pred_region
          _
        $region24: #{tpu_custom_call.1} parent=11 // pred_fallthru
          _
        // Predicated region
        $region25: #{tpu_custom_call.1} parent=11 // pred_check
          %p289 = pneg %p174
        $region26: #{tpu_custom_call.1} parent=11 // pred_check_branch
          %291 = sbr.rel (%p289) target = $region28
        $region27: #{tpu_custom_call.1} parent=11 // pred_region
          _
        $region28: #{tpu_custom_call.1} parent=11 // pred_fallthru
          _
        // Predicated region
        $region29: #{tpu_custom_call.1} parent=11 // pred_check
          %p292 = pneg %p195
        $region30: #{tpu_custom_call.1} parent=11 // pred_check_branch
          %294 = sbr.rel (%p292) target = $region32
        $region31: #{tpu_custom_call.1} parent=11 // pred_region
          _
        $region32: #{tpu_custom_call.1} parent=11 // pred_fallthru
          _
        // Predicated region
        $region33: #{tpu_custom_call.1} parent=11 // pred_check
          %p295 = pneg %p216
        $region34: #{tpu_custom_call.1} parent=11 // pred_check_branch
          %297 = sbr.rel (%p295) target = $region36
        $region35: #{tpu_custom_call.1} parent=11 // pred_region
          _
        $region36: #{tpu_custom_call.1} parent=11 // pred_fallthru
          _
        // Predicated region
        $region37: #{tpu_custom_call.1} parent=11 // pred_check
          %p298 = pneg %p237
        $region38: #{tpu_custom_call.1} parent=11 // pred_check_branch
          %300 = sbr.rel (%p298) target = $region40
        $region39: #{tpu_custom_call.1} parent=11 // pred_region
          _
        $region40: #{tpu_custom_call.1} parent=11 // pred_fallthru
          _
      $region12: #{tpu_custom_call.1} parent=5 // pred_fallthru
        _
      %p301 = scmp.lt.s32.totalorder %s24, 2
      // Predicated region
      $region41: #{tpu_custom_call.1} parent=5 // pred_check
        %p302 = pneg %p301
      $region42: #{tpu_custom_call.1} parent=5 // pred_check_branch
        %304 = sbr.rel (%p302) target = $region44
      $region43: #{tpu_custom_call.1} parent=5 // pred_region
        // Predicated region
        $region45: #{tpu_custom_call.1} parent=43 // pred_check
          %p305 = pneg %p58
        $region46: #{tpu_custom_call.1} parent=43 // pred_check_branch
          %307 = sbr.rel (%p305) target = $region48
        $region47: #{tpu_custom_call.1} parent=43 // pred_region
          %s308 = sand.u32 %s48, 1
          %s309 = scalar_lea.sflag [#allocation3], %s308
          %s310 = sand.u32 %s48, 1
          %s311 = smul.addr %s310, 8
          %s312 = scalar_lea.vmem [#allocation2], %s311
          %s314 = ssub.s32 128, 128
          %315 = vsyncadd %s309, %s314
          %s316 = sadd.s32 %s32, %s31
          %s317 = smul.addr %s316, 128
          %s318 = scalar_lea.hbm %s0, %s317
          %s320 = sshll.u32 %s312, 4
          %s321 = int_to_ptr.vmem [resolvable:$true] %s320
          %323 = dma.hbm_to_vmem [thread:$0]  %s318, 128, %s321, %s309
        $region48: #{tpu_custom_call.1} parent=43 // pred_fallthru
          _
        // Predicated region
        $region49: #{tpu_custom_call.1} parent=43 // pred_check
          %p324 = pneg %p84
        $region50: #{tpu_custom_call.1} parent=43 // pred_check_branch
          %326 = sbr.rel (%p324) target = $region52
        $region51: #{tpu_custom_call.1} parent=43 // pred_region
          %s327 = sand.u32 %s74, 1
          %s328 = scalar_lea.sflag [#allocation6], %s327
          %s329 = sand.u32 %s74, 1
          %s330 = smul.addr %s329, 8
          %s331 = scalar_lea.vmem [#allocation5], %s330
          %s333 = ssub.s32 128, 128
          %334 = vsyncadd %s328, %s333
          %s335 = smul.addr %s31, 128
          %s336 = scalar_lea.hbm %s1, %s335
          %s338 = sshll.u32 %s331, 4
          %s339 = int_to_ptr.vmem [resolvable:$true] %s338
          %341 = dma.hbm_to_vmem [thread:$0]  %s336, 128, %s339, %s328
        $region52: #{tpu_custom_call.1} parent=43 // pred_fallthru
          _
      $region44: #{tpu_custom_call.1} parent=5 // pred_fallthru
        _
      %p342 = scmp.le.s32.totalorder 1, %s24
      %p343 = scmp.lt.s32.totalorder %s24, 3
      %p344 = pnand %p342, %p343
      %p345 = pneg %p344
      // Predicated region
      $region53: #{tpu_custom_call.1} parent=5 // pred_check
        _
      $region54: #{tpu_custom_call.1} parent=5 // pred_check_branch
        %347 = sbr.rel (%p344) target = $region56
      $region55: #{tpu_custom_call.1} parent=5 // pred_region
        %s348 = ssub.s32 %s24, 1
        %s349 = sand.u32 %s51, 1
        %s350 = scalar_lea.sflag [#allocation3], %s349
        %s351 = sand.u32 %s51, 1
        %s352 = smul.addr %s351, 8
        %s353 = scalar_lea.vmem [#allocation2], %s352
        // Predicated region
        $region57: #{tpu_custom_call.1} parent=55 // pred_check
          %p354 = pneg %p64
        $region58: #{tpu_custom_call.1} parent=55 // pred_check_branch
          %356 = sbr.rel (%p354) target = $region60
        $region59: #{tpu_custom_call.1} parent=55 // pred_region
          %357 = dma.done %s350, 128
        $region60: #{tpu_custom_call.1} parent=55 // pred_fallthru
          _
        %s358 = sand.u32 %s77, 1
        %s359 = scalar_lea.sflag [#allocation6], %s358
        %s360 = sand.u32 %s77, 1
        %s361 = smul.addr %s360, 8
        %s362 = scalar_lea.vmem [#allocation5], %s361
        // Predicated region
        $region61: #{tpu_custom_call.1} parent=55 // pred_check
          %p363 = pneg %p90
        $region62: #{tpu_custom_call.1} parent=55 // pred_check_branch
          %365 = sbr.rel (%p363) target = $region64
        $region63: #{tpu_custom_call.1} parent=55 // pred_region
          %366 = dma.done %s359, 128
        $region64: #{tpu_custom_call.1} parent=55 // pred_fallthru
          _
        %s367 = sand.u32 %s51, 1
        %s368 = scalar_lea.sflag [#allocation3], %s367
        %s369 = sand.u32 %s51, 1
        %s370 = smul.addr %s369, 8
        %s371 = scalar_lea.vmem [#allocation2], %s370
        %p372 = pneg %p64
        %p373 = pneg %p61
        %s374 = sand.u32 %s77, 1
        %s375 = scalar_lea.sflag [#allocation6], %s374
        %s376 = sand.u32 %s77, 1
        %s377 = smul.addr %s376, 8
        %s378 = scalar_lea.vmem [#allocation5], %s377
        %p379 = pneg %p90
        %p380 = pneg %p87
        %p381 = pneg %p111
        %p382 = pneg %p108
        %p383 = pneg %p132
        %p384 = pneg %p129
        %p385 = pneg %p153
        %p386 = pneg %p150
        %p387 = pneg %p174
        %p388 = pneg %p171
        %p389 = pneg %p195
        %p390 = pneg %p192
        %p391 = pneg %p216
        %p392 = pneg %p213
        %p393 = pneg %p237
        %p394 = pneg %p234
        %p395 = pneg %p265
        %p396 = pneg %p262
        %s397 = sand.u32 %s252, 1
        %s398 = scalar_lea.sflag [#allocation4], %s397
        %s399 = sand.u32 %s252, 1
        %s400 = smul.addr %s399, 8
        %s401 = scalar_lea.vmem [#allocation7], %s400
        %v402 = vld [vmem:[%s353] sm:$0xff]
        %v403 = vld [vmem:[%s362] sm:$0xff]
        %v404 = vld [vmem:[%s2] sm:$0xff]
        %v405 = vld [vmem:[%s2 + $0x8] sm:$0xff]
        %v406 = vld [vmem:[%s2 + $0x10] sm:$0xff]
        %v407 = vld [vmem:[%s2 + $0x18] sm:$0xff]
        %v408 = vld [vmem:[%s3] sm:$0x1]
        %v409 = vld [vmem:[%s8] sm:$0x3f]
        %v411 = vlaneseq
        %v412 = vshrl.u32 %v411, 7
        %v413 = vsub.s32 0, %v412
        %v414 = vrot.slane %v408, %v413
        %vm416 = vcmask 261120
        %v418 = vsel %vm416, %v403, 0
        %420 = vmatprep.subr.mxu0 0.0
        %421 = vmatpush1.msra.mxu0 0.0
        %422 = vmatprep.subr.mxu0 0.0
        %423 = vmatpush1.msra.mxu0 0.0
        %424 = vmatprep.subr.mxu0 0.0
        %425 = vmatpush1.msra.mxu0 0.0
        %426 = vmatprep.subr.mxu0 0.0
        %427 = vmatpush1.msra.mxu0 0.0
        %428 = vmatprep.subr.mxu0 0.0
        %429 = vmatpush1.msra.mxu0 0.0
        %430 = vmatprep.subr.mxu0 0.0
        %431 = vmatpush1.msra.mxu0 0.0
        %432 = vmatprep.subr.mxu0 0.0
        %433 = vmatpush1.msra.mxu0 0.0
        %434 = vmatprep.subr.mxu0 0.0
        %435 = vmatpush1.msra.mxu0 0.0
        %436 = vmatprep.subr.mxu0 0.0
        %437 = vmatpush1.msra.mxu0 0.0
        %438 = vmatprep.subr.mxu0 0.0
        %439 = vmatpush1.msra.mxu0 0.0
        %440 = vmatprep.subr.mxu0 0.0
        %441 = vmatpush1.msra.mxu0 0.0
        %442 = vmatprep.subr.mxu0 0.0
        %443 = vmatpush1.msra.mxu0 0.0
        %444 = vmatprep.subr.mxu0 0.0
        %445 = vmatpush1.msra.mxu0 %v407
        %446 = vmatprep.subr.mxu0 0.0
        %447 = vmatpush1.msra.mxu0 %v406
        %448 = vmatprep.subr.mxu0 0.0
        %449 = vmatpush1.msra.mxu0 %v405
        %450 = vmatprep.subr.mxu0 0.0
        %451 = vmatpush1.msra.mxu0 %v404
        %452 = vmatprep.subr.mxu0 0.0
        %453 = vmatpush2.msra.mxu0 0.0
        %454 = vmatprep.subr.mxu0 0.0
        %455 = vmatpush2.msra.mxu0 0.0
        %456 = vmatprep.subr.mxu0 0.0
        %457 = vmatpush2.msra.mxu0 0.0
        %458 = vmatprep.subr.mxu0 0.0
        %459 = vmatpush2.msra.mxu0 0.0
        %460 = vmatprep.subr.mxu0 0.0
        %461 = vmatpush2.msra.mxu0 0.0
        %462 = vmatprep.subr.mxu0 0.0
        %463 = vmatpush2.msra.mxu0 0.0
        %464 = vmatprep.subr.mxu0 0.0
        %465 = vmatpush2.msra.mxu0 0.0
        %466 = vmatprep.subr.mxu0 0.0
        %467 = vmatpush2.msra.mxu0 0.0
        %468 = vmatprep.subr.mxu0 0.0
        %469 = vmatpush2.msra.mxu0 0.0
        %470 = vmatprep.subr.mxu0 0.0
        %471 = vmatpush2.msra.mxu0 0.0
        %472 = vmatprep.subr.mxu0 0.0
        %473 = vmatpush2.msra.mxu0 0.0
        %474 = vmatprep.subr.mxu0 0.0
        %475 = vmatpush2.msra.mxu0 0.0
        %476 = vmatprep.subr.mxu0 0.0
        %477 = vmatpush2.msra.mxu0 0.0
        %478 = vmatprep.subr.mxu0 0.0
        %479 = vmatpush2.msra.mxu0 0.0
        %480 = vmatprep.subr.mxu0 0.0
        %481 = vmatpush2.msra.mxu0 0.0
        %482 = vmatprep.subr.mxu0 0.0
        %483 = vmatpush2.msra.mxu0 0.0
        %484 = vmatprep.mubr.f32.mxu0 0.0
        %485 = vmatmul.mubr.f32.gmra.mxu0 %v418
        %v486 = vpop.f32.mrf.mxu0
        %v487 = vadd.f32 %v414, %v486
        %v488 = vpop.f32.mrf.mxu0
        %489 = vdwg.mxu0
        %491 = vrot.lane.b32.xlu0 %v487, 120
        %v492 = vpop.permute.xlu0 %491
        %494 = vrot.lane.b32.xlu0 %v487, 112
        %v495 = vpop.permute.xlu0 %494
        %497 = vrot.lane.b32.xlu0 %v487, 104
        %v498 = vpop.permute.xlu0 %497
        %v500 = vcombine.low %v487, %v495
        %v501 = vcombine.high %v487, %v495
        %v503 = vunpack.c.l.s4 1983009808
        %v504 = vunpack.c.0.s8 %v503
        %v505 = vlaneseq
        %v506 = vshrl.u32 %v505, 7
        %v507 = vsub.s32 %v504, %v506
        %v508 = vrot.slane %v500, %v507
        %v510 = vunpack.c.l.s4 1983009808
        %v511 = vunpack.c.0.s8 %v510
        %v512 = vlaneseq
        %v513 = vshrl.u32 %v512, 7
        %v514 = vsub.s32 %v511, %v513
        %v515 = vrot.slane %v501, %v514
        %v516 = vcombine.low %v492, %v498
        %v517 = vcombine.high %v492, %v498
        %v519 = vunpack.c.l.s4 1983009808
        %v520 = vunpack.c.0.s8 %v519
        %v521 = vlaneseq
        %v522 = vshrl.u32 %v521, 7
        %v523 = vsub.s32 %v520, %v522
        %v524 = vrot.slane %v516, %v523
        %v526 = vunpack.c.l.s4 1983009808
        %v527 = vunpack.c.0.s8 %v526
        %v528 = vlaneseq
        %v529 = vshrl.u32 %v528, 7
        %v530 = vsub.s32 %v527, %v529
        %v531 = vrot.slane %v517, %v530
        %v532 = vcombine.low %v508, %v524
        %v533 = vcombine.high %v508, %v524
        %v535 = vunpack.c.l.s4 1934713408
        %v536 = vunpack.c.0.s8 %v535
        %v537 = vlaneseq
        %v538 = vshrl.u32 %v537, 7
        %v539 = vsub.s32 %v536, %v538
        %v540 = vrot.slane %v532, %v539
        %v542 = vunpack.c.l.s4 1934713408
        %v543 = vunpack.c.0.s8 %v542
        %v544 = vlaneseq
        %v545 = vshrl.u32 %v544, 7
        %v546 = vsub.s32 %v543, %v545
        %v547 = vrot.slane %v533, %v546
        %v548 = vcombine.low %v515, %v531
        %v549 = vcombine.high %v515, %v531
        %v551 = vunpack.c.l.s4 1934713408
        %v552 = vunpack.c.0.s8 %v551
        %v553 = vlaneseq
        %v554 = vshrl.u32 %v553, 7
        %v555 = vsub.s32 %v552, %v554
        %v556 = vrot.slane %v548, %v555
        %v558 = vunpack.c.l.s4 1934713408
        %v559 = vunpack.c.0.s8 %v558
        %v560 = vlaneseq
        %v561 = vshrl.u32 %v560, 7
        %v562 = vsub.s32 %v559, %v561
        %v563 = vrot.slane %v549, %v562
        %v564 = vcombine.high %v540, 0.0
        %v565 = vcombine.high %v547, 0.0
        %v566 = vcombine.high %v556, 0.0
        %v567 = vcombine.high %v563, 0.0
        %v568 = vcombine.low %v540, %v547
        %v570 = vunpack.c.l.s4 1983009808
        %v571 = vunpack.c.0.s8 %v570
        %v572 = vlaneseq
        %v573 = vshrl.u32 %v572, 7
        %v574 = vsub.s32 %v571, %v573
        %v575 = vrot.slane %v568, %v574
        %v576 = vcombine.low %v564, %v565
        %v578 = vunpack.c.l.s4 1983009808
        %v579 = vunpack.c.0.s8 %v578
        %v580 = vlaneseq
        %v581 = vshrl.u32 %v580, 7
        %v582 = vsub.s32 %v579, %v581
        %v583 = vrot.slane %v576, %v582
        %v584 = vcombine.low %v556, %v563
        %v586 = vunpack.c.l.s4 1983009808
        %v587 = vunpack.c.0.s8 %v586
        %v588 = vlaneseq
        %v589 = vshrl.u32 %v588, 7
        %v590 = vsub.s32 %v587, %v589
        %v591 = vrot.slane %v584, %v590
        %v592 = vcombine.low %v566, %v567
        %v594 = vunpack.c.l.s4 1983009808
        %v595 = vunpack.c.0.s8 %v594
        %v596 = vlaneseq
        %v597 = vshrl.u32 %v596, 7
        %v598 = vsub.s32 %v595, %v597
        %v599 = vrot.slane %v592, %v598
        %v600 = vcombine.low %v575, %v583
        %v601 = vcombine.high %v575, %v583
        %v603 = vunpack.c.l.s4 1934713408
        %v604 = vunpack.c.0.s8 %v603
        %v605 = vlaneseq
        %v606 = vshrl.u32 %v605, 7
        %v607 = vsub.s32 %v604, %v606
        %v608 = vrot.slane %v600, %v607
        %v610 = vunpack.c.l.s4 1934713408
        %v611 = vunpack.c.0.s8 %v610
        %v612 = vlaneseq
        %v613 = vshrl.u32 %v612, 7
        %v614 = vsub.s32 %v611, %v613
        %v615 = vrot.slane %v601, %v614
        %v616 = vcombine.low %v591, %v599
        %v617 = vcombine.high %v591, %v599
        %v619 = vunpack.c.l.s4 1934713408
        %v620 = vunpack.c.0.s8 %v619
        %v621 = vlaneseq
        %v622 = vshrl.u32 %v621, 7
        %v623 = vsub.s32 %v620, %v622
        %v624 = vrot.slane %v616, %v623
        %v626 = vunpack.c.l.s4 1934713408
        %v627 = vunpack.c.0.s8 %v626
        %v628 = vlaneseq
        %v629 = vshrl.u32 %v628, 7
        %v630 = vsub.s32 %v627, %v629
        %v631 = vrot.slane %v617, %v630
        %v632 = vcombine.low %v608, %v624
        %v633 = vcombine.high %v608, %v624
        %v634 = vcombine.low %v615, %v631
        %v635 = vcombine.high %v615, %v631
        %636 = vrot.lane.b32.xlu0 %v487, 96
        %v637 = vpop.permute.xlu0 %636
        %638 = vrot.lane.b32.xlu0 %v492, 96
        %v639 = vpop.permute.xlu0 %638
        %640 = vrot.lane.b32.xlu0 %v495, 96
        %v641 = vpop.permute.xlu0 %640
        %642 = vrot.lane.b32.xlu0 %v498, 96
        %v643 = vpop.permute.xlu0 %642
        %v648 = vcombine.low %v637, %v641
        %v649 = vcombine.high %v637, %v641
        %v651 = vunpack.c.l.s4 1983009808
        %v652 = vunpack.c.0.s8 %v651
        %v653 = vlaneseq
        %v654 = vshrl.u32 %v653, 7
        %v655 = vsub.s32 %v652, %v654
        %v656 = vrot.slane %v648, %v655
        %v658 = vunpack.c.l.s4 1983009808
        %v659 = vunpack.c.0.s8 %v658
        %v660 = vlaneseq
        %v661 = vshrl.u32 %v660, 7
        %v662 = vsub.s32 %v659, %v661
        %v663 = vrot.slane %v649, %v662
        %v664 = vcombine.low %v639, %v643
        %v665 = vcombine.high %v639, %v643
        %v667 = vunpack.c.l.s4 1983009808
        %v668 = vunpack.c.0.s8 %v667
        %v669 = vlaneseq
        %v670 = vshrl.u32 %v669, 7
        %v671 = vsub.s32 %v668, %v670
        %v672 = vrot.slane %v664, %v671
        %v674 = vunpack.c.l.s4 1983009808
        %v675 = vunpack.c.0.s8 %v674
        %v676 = vlaneseq
        %v677 = vshrl.u32 %v676, 7
        %v678 = vsub.s32 %v675, %v677
        %v679 = vrot.slane %v665, %v678
        %v680 = vcombine.low %v656, %v672
        %v681 = vcombine.high %v656, %v672
        %v683 = vunpack.c.l.s4 1934713408
        %v684 = vunpack.c.0.s8 %v683
        %v685 = vlaneseq
        %v686 = vshrl.u32 %v685, 7
        %v687 = vsub.s32 %v684, %v686
        %v688 = vrot.slane %v680, %v687
        %v690 = vunpack.c.l.s4 1934713408
        %v691 = vunpack.c.0.s8 %v690
        %v692 = vlaneseq
        %v693 = vshrl.u32 %v692, 7
        %v694 = vsub.s32 %v691, %v693
        %v695 = vrot.slane %v681, %v694
        %v696 = vcombine.low %v663, %v679
        %v697 = vcombine.high %v663, %v679
        %v699 = vunpack.c.l.s4 1934713408
        %v700 = vunpack.c.0.s8 %v699
        %v701 = vlaneseq
        %v702 = vshrl.u32 %v701, 7
        %v703 = vsub.s32 %v700, %v702
        %v704 = vrot.slane %v696, %v703
        %v706 = vunpack.c.l.s4 1934713408
        %v707 = vunpack.c.0.s8 %v706
        %v708 = vlaneseq
        %v709 = vshrl.u32 %v708, 7
        %v710 = vsub.s32 %v707, %v709
        %v711 = vrot.slane %v697, %v710
        %v712 = vcombine.high %v688, 0.0
        %v713 = vcombine.high %v695, 0.0
        %v714 = vcombine.high %v704, 0.0
        %v715 = vcombine.high %v711, 0.0
        %v716 = vcombine.low %v688, %v695
        %v718 = vunpack.c.l.s4 1983009808
        %v719 = vunpack.c.0.s8 %v718
        %v720 = vlaneseq
        %v721 = vshrl.u32 %v720, 7
        %v722 = vsub.s32 %v719, %v721
        %v723 = vrot.slane %v716, %v722
        %v724 = vcombine.low %v712, %v713
        %v726 = vunpack.c.l.s4 1983009808
        %v727 = vunpack.c.0.s8 %v726
        %v728 = vlaneseq
        %v729 = vshrl.u32 %v728, 7
        %v730 = vsub.s32 %v727, %v729
        %v731 = vrot.slane %v724, %v730
        %v732 = vcombine.low %v704, %v711
        %v734 = vunpack.c.l.s4 1983009808
        %v735 = vunpack.c.0.s8 %v734
        %v736 = vlaneseq
        %v737 = vshrl.u32 %v736, 7
        %v738 = vsub.s32 %v735, %v737
        %v739 = vrot.slane %v732, %v738
        %v740 = vcombine.low %v714, %v715
        %v742 = vunpack.c.l.s4 1983009808
        %v743 = vunpack.c.0.s8 %v742
        %v744 = vlaneseq
        %v745 = vshrl.u32 %v744, 7
        %v746 = vsub.s32 %v743, %v745
        %v747 = vrot.slane %v740, %v746
        %v748 = vcombine.low %v723, %v731
        %v749 = vcombine.high %v723, %v731
        %v751 = vunpack.c.l.s4 1934713408
        %v752 = vunpack.c.0.s8 %v751
        %v753 = vlaneseq
        %v754 = vshrl.u32 %v753, 7
        %v755 = vsub.s32 %v752, %v754
        %v756 = vrot.slane %v748, %v755
        %v758 = vunpack.c.l.s4 1934713408
        %v759 = vunpack.c.0.s8 %v758
        %v760 = vlaneseq
        %v761 = vshrl.u32 %v760, 7
        %v762 = vsub.s32 %v759, %v761
        %v763 = vrot.slane %v749, %v762
        %v764 = vcombine.low %v739, %v747
        %v765 = vcombine.high %v739, %v747
        %v767 = vunpack.c.l.s4 1934713408
        %v768 = vunpack.c.0.s8 %v767
        %v769 = vlaneseq
        %v770 = vshrl.u32 %v769, 7
        %v771 = vsub.s32 %v768, %v770
        %v772 = vrot.slane %v764, %v771
        %v774 = vunpack.c.l.s4 1934713408
        %v775 = vunpack.c.0.s8 %v774
        %v776 = vlaneseq
        %v777 = vshrl.u32 %v776, 7
        %v778 = vsub.s32 %v775, %v777
        %v779 = vrot.slane %v765, %v778
        %v780 = vcombine.low %v756, %v772
        %v781 = vcombine.high %v756, %v772
        %v782 = vcombine.low %v763, %v779
        %v783 = vcombine.high %v763, %v779
        %784 = vrot.lane.b32.xlu0 %v487, 64
        %v785 = vpop.permute.xlu0 %784
        %786 = vrot.lane.b32.xlu0 %v492, 64
        %v787 = vpop.permute.xlu0 %786
        %788 = vrot.lane.b32.xlu0 %v495, 64
        %v789 = vpop.permute.xlu0 %788
        %790 = vrot.lane.b32.xlu0 %v498, 64
        %v791 = vpop.permute.xlu0 %790
        %v796 = vcombine.low %v785, %v789
        %v797 = vcombine.high %v785, %v789
        %v799 = vunpack.c.l.s4 1983009808
        %v800 = vunpack.c.0.s8 %v799
        %v801 = vlaneseq
        %v802 = vshrl.u32 %v801, 7
        %v803 = vsub.s32 %v800, %v802
        %v804 = vrot.slane %v796, %v803
        %v806 = vunpack.c.l.s4 1983009808
        %v807 = vunpack.c.0.s8 %v806
        %v808 = vlaneseq
        %v809 = vshrl.u32 %v808, 7
        %v810 = vsub.s32 %v807, %v809
        %v811 = vrot.slane %v797, %v810
        %v812 = vcombine.low %v787, %v791
        %v813 = vcombine.high %v787, %v791
        %v815 = vunpack.c.l.s4 1983009808
        %v816 = vunpack.c.0.s8 %v815
        %v817 = vlaneseq
        %v818 = vshrl.u32 %v817, 7
        %v819 = vsub.s32 %v816, %v818
        %v820 = vrot.slane %v812, %v819
        %v822 = vunpack.c.l.s4 1983009808
        %v823 = vunpack.c.0.s8 %v822
        %v824 = vlaneseq
        %v825 = vshrl.u32 %v824, 7
        %v826 = vsub.s32 %v823, %v825
        %v827 = vrot.slane %v813, %v826
        %v828 = vcombine.low %v804, %v820
        %v829 = vcombine.high %v804, %v820
        %v831 = vunpack.c.l.s4 1934713408
        %v832 = vunpack.c.0.s8 %v831
        %v833 = vlaneseq
        %v834 = vshrl.u32 %v833, 7
        %v835 = vsub.s32 %v832, %v834
        %v836 = vrot.slane %v828, %v835
        %v838 = vunpack.c.l.s4 1934713408
        %v839 = vunpack.c.0.s8 %v838
        %v840 = vlaneseq
        %v841 = vshrl.u32 %v840, 7
        %v842 = vsub.s32 %v839, %v841
        %v843 = vrot.slane %v829, %v842
        %v844 = vcombine.low %v811, %v827
        %v845 = vcombine.high %v811, %v827
        %v847 = vunpack.c.l.s4 1934713408
        %v848 = vunpack.c.0.s8 %v847
        %v849 = vlaneseq
        %v850 = vshrl.u32 %v849, 7
        %v851 = vsub.s32 %v848, %v850
        %v852 = vrot.slane %v844, %v851
        %v854 = vunpack.c.l.s4 1934713408
        %v855 = vunpack.c.0.s8 %v854
        %v856 = vlaneseq
        %v857 = vshrl.u32 %v856, 7
        %v858 = vsub.s32 %v855, %v857
        %v859 = vrot.slane %v845, %v858
        %v860 = vcombine.high %v836, 0.0
        %v861 = vcombine.high %v843, 0.0
        %v862 = vcombine.high %v852, 0.0
        %v863 = vcombine.high %v859, 0.0
        %v864 = vcombine.low %v836, %v843
        %v866 = vunpack.c.l.s4 1983009808
        %v867 = vunpack.c.0.s8 %v866
        %v868 = vlaneseq
        %v869 = vshrl.u32 %v868, 7
        %v870 = vsub.s32 %v867, %v869
        %v871 = vrot.slane %v864, %v870
        %v872 = vcombine.low %v860, %v861
        %v874 = vunpack.c.l.s4 1983009808
        %v875 = vunpack.c.0.s8 %v874
        %v876 = vlaneseq
        %v877 = vshrl.u32 %v876, 7
        %v878 = vsub.s32 %v875, %v877
        %v879 = vrot.slane %v872, %v878
        %v880 = vcombine.low %v852, %v859
        %v882 = vunpack.c.l.s4 1983009808
        %v883 = vunpack.c.0.s8 %v882
        %v884 = vlaneseq
        %v885 = vshrl.u32 %v884, 7
        %v886 = vsub.s32 %v883, %v885
        %v887 = vrot.slane %v880, %v886
        %v888 = vcombine.low %v862, %v863
        %v890 = vunpack.c.l.s4 1983009808
        %v891 = vunpack.c.0.s8 %v890
        %v892 = vlaneseq
        %v893 = vshrl.u32 %v892, 7
        %v894 = vsub.s32 %v891, %v893
        %v895 = vrot.slane %v888, %v894
        %v896 = vcombine.low %v871, %v879
        %v897 = vcombine.high %v871, %v879
        %v899 = vunpack.c.l.s4 1934713408
        %v900 = vunpack.c.0.s8 %v899
        %v901 = vlaneseq
        %v902 = vshrl.u32 %v901, 7
        %v903 = vsub.s32 %v900, %v902
        %v904 = vrot.slane %v896, %v903
        %v906 = vunpack.c.l.s4 1934713408
        %v907 = vunpack.c.0.s8 %v906
        %v908 = vlaneseq
        %v909 = vshrl.u32 %v908, 7
        %v910 = vsub.s32 %v907, %v909
        %v911 = vrot.slane %v897, %v910
        %v912 = vcombine.low %v887, %v895
        %v913 = vcombine.high %v887, %v895
        %v915 = vunpack.c.l.s4 1934713408
        %v916 = vunpack.c.0.s8 %v915
        %v917 = vlaneseq
        %v918 = vshrl.u32 %v917, 7
        %v919 = vsub.s32 %v916, %v918
        %v920 = vrot.slane %v912, %v919
        %v922 = vunpack.c.l.s4 1934713408
        %v923 = vunpack.c.0.s8 %v922
        %v924 = vlaneseq
        %v925 = vshrl.u32 %v924, 7
        %v926 = vsub.s32 %v923, %v925
        %v927 = vrot.slane %v913, %v926
        %v928 = vcombine.low %v904, %v920
        %v929 = vcombine.high %v904, %v920
        %v930 = vcombine.low %v911, %v927
        %v931 = vcombine.high %v911, %v927
        %vm932 = vcmask 64512
        %v934 = vsel %vm932, %v632, 0
        %v937 = vsel %vm932, %v780, 0
        %939 = vmatprep.subr.mxu0 0.0
        %940 = vmatpush1.xpose.msra.mxu0 0.0
        %941 = vmatprep.subr.mxu0 0.0
        %942 = vmatpush1.xpose.msra.mxu0 0.0
        %943 = vmatprep.subr.mxu0 0.0
        %944 = vmatpush1.xpose.msra.mxu0 0.0
        %945 = vmatprep.subr.mxu0 0.0
        %946 = vmatpush1.xpose.msra.mxu0 0.0
        %947 = vmatprep.subr.mxu0 0.0
        %948 = vmatpush1.xpose.msra.mxu0 0.0
        %949 = vmatprep.subr.mxu0 0.0
        %950 = vmatpush1.xpose.msra.mxu0 0.0
        %951 = vmatprep.subr.mxu0 0.0
        %952 = vmatpush1.xpose.msra.mxu0 0.0
        %953 = vmatprep.subr.mxu0 0.0
        %954 = vmatpush1.xpose.msra.mxu0 0.0
        %955 = vmatprep.subr.mxu0 0.0
        %956 = vmatpush1.xpose.msra.mxu0 0.0
        %957 = vmatprep.subr.mxu0 0.0
        %958 = vmatpush1.xpose.msra.mxu0 0.0
        %959 = vmatprep.subr.mxu0 0.0
        %960 = vmatpush1.xpose.msra.mxu0 0.0
        %961 = vmatprep.subr.mxu0 0.0
        %962 = vmatpush1.xpose.msra.mxu0 0.0
        %963 = vmatprep.subr.mxu0 0.0
        %964 = vmatpush1.xpose.msra.mxu0 0.0
        %965 = vmatprep.subr.mxu0 0.0
        %966 = vmatpush1.xpose.msra.mxu0 0.0
        %967 = vmatprep.subr.mxu0 0.0
        %968 = vmatpush1.xpose.msra.mxu0 0.0
        %969 = vmatprep.subr.mxu0 0.0
        %970 = vmatpush1.xpose.msra.mxu0 %v937
        %971 = vmatprep.subr.mxu0 0.0
        %972 = vmatpush2.xpose.msra.mxu0 0.0
        %973 = vmatprep.subr.mxu0 0.0
        %974 = vmatpush2.xpose.msra.mxu0 0.0
        %975 = vmatprep.subr.mxu0 0.0
        %976 = vmatpush2.xpose.msra.mxu0 0.0
        %977 = vmatprep.subr.mxu0 0.0
        %978 = vmatpush2.xpose.msra.mxu0 0.0
        %979 = vmatprep.subr.mxu0 0.0
        %980 = vmatpush2.xpose.msra.mxu0 0.0
        %981 = vmatprep.subr.mxu0 0.0
        %982 = vmatpush2.xpose.msra.mxu0 0.0
        %983 = vmatprep.subr.mxu0 0.0
        %984 = vmatpush2.xpose.msra.mxu0 0.0
        %985 = vmatprep.subr.mxu0 0.0
        %986 = vmatpush2.xpose.msra.mxu0 0.0
        %987 = vmatprep.subr.mxu0 0.0
        %988 = vmatpush2.xpose.msra.mxu0 0.0
        %989 = vmatprep.subr.mxu0 0.0
        %990 = vmatpush2.xpose.msra.mxu0 0.0
        %991 = vmatprep.subr.mxu0 0.0
        %992 = vmatpush2.xpose.msra.mxu0 0.0
        %993 = vmatprep.subr.mxu0 0.0
        %994 = vmatpush2.xpose.msra.mxu0 0.0
        %995 = vmatprep.subr.mxu0 0.0
        %996 = vmatpush2.xpose.msra.mxu0 0.0
        %997 = vmatprep.subr.mxu0 0.0
        %998 = vmatpush2.xpose.msra.mxu0 0.0
        %999 = vmatprep.subr.mxu0 0.0
        %1000 = vmatpush2.xpose.msra.mxu0 0.0
        %1001 = vmatprep.subr.mxu0 0.0
        %1002 = vmatpush2.xpose.msra.mxu0 0.0
        %1003 = vmatprep.mubr.f32.mxu0 0.0
        %1004 = vmatmul.mubr.f32.gmra.mxu0 %v934
        %v1005 = vpop.f32.mrf.mxu0
        %v1006 = vadd.f32 0.0, %v1005
        %v1007 = vpop.f32.mrf.mxu0
        %1008 = vdwg.mxu0
        %v1010 = vsel %vm932, %v633, 0
        %v1013 = vsel %vm932, %v781, 0
        %1015 = vmatprep.subr.mxu0 0.0
        %1016 = vmatpush1.xpose.msra.mxu0 0.0
        %1017 = vmatprep.subr.mxu0 0.0
        %1018 = vmatpush1.xpose.msra.mxu0 0.0
        %1019 = vmatprep.subr.mxu0 0.0
        %1020 = vmatpush1.xpose.msra.mxu0 0.0
        %1021 = vmatprep.subr.mxu0 0.0
        %1022 = vmatpush1.xpose.msra.mxu0 0.0
        %1023 = vmatprep.subr.mxu0 0.0
        %1024 = vmatpush1.xpose.msra.mxu0 0.0
        %1025 = vmatprep.subr.mxu0 0.0
        %1026 = vmatpush1.xpose.msra.mxu0 0.0
        %1027 = vmatprep.subr.mxu0 0.0
        %1028 = vmatpush1.xpose.msra.mxu0 0.0
        %1029 = vmatprep.subr.mxu0 0.0
        %1030 = vmatpush1.xpose.msra.mxu0 0.0
        %1031 = vmatprep.subr.mxu0 0.0
        %1032 = vmatpush1.xpose.msra.mxu0 0.0
        %1033 = vmatprep.subr.mxu0 0.0
        %1034 = vmatpush1.xpose.msra.mxu0 0.0
        %1035 = vmatprep.subr.mxu0 0.0
        %1036 = vmatpush1.xpose.msra.mxu0 0.0
        %1037 = vmatprep.subr.mxu0 0.0
        %1038 = vmatpush1.xpose.msra.mxu0 0.0
        %1039 = vmatprep.subr.mxu0 0.0
        %1040 = vmatpush1.xpose.msra.mxu0 0.0
        %1041 = vmatprep.subr.mxu0 0.0
        %1042 = vmatpush1.xpose.msra.mxu0 0.0
        %1043 = vmatprep.subr.mxu0 0.0
        %1044 = vmatpush1.xpose.msra.mxu0 0.0
        %1045 = vmatprep.subr.mxu0 0.0
        %1046 = vmatpush1.xpose.msra.mxu0 %v1013
        %1047 = vmatprep.subr.mxu0 0.0
        %1048 = vmatpush2.xpose.msra.mxu0 0.0
        %1049 = vmatprep.subr.mxu0 0.0
        %1050 = vmatpush2.xpose.msra.mxu0 0.0
        %1051 = vmatprep.subr.mxu0 0.0
        %1052 = vmatpush2.xpose.msra.mxu0 0.0
        %1053 = vmatprep.subr.mxu0 0.0
        %1054 = vmatpush2.xpose.msra.mxu0 0.0
        %1055 = vmatprep.subr.mxu0 0.0
        %1056 = vmatpush2.xpose.msra.mxu0 0.0
        %1057 = vmatprep.subr.mxu0 0.0
        %1058 = vmatpush2.xpose.msra.mxu0 0.0
        %1059 = vmatprep.subr.mxu0 0.0
        %1060 = vmatpush2.xpose.msra.mxu0 0.0
        %1061 = vmatprep.subr.mxu0 0.0
        %1062 = vmatpush2.xpose.msra.mxu0 0.0
        %1063 = vmatprep.subr.mxu0 0.0
        %1064 = vmatpush2.xpose.msra.mxu0 0.0
        %1065 = vmatprep.subr.mxu0 0.0
        %1066 = vmatpush2.xpose.msra.mxu0 0.0
        %1067 = vmatprep.subr.mxu0 0.0
        %1068 = vmatpush2.xpose.msra.mxu0 0.0
        %1069 = vmatprep.subr.mxu0 0.0
        %1070 = vmatpush2.xpose.msra.mxu0 0.0
        %1071 = vmatprep.subr.mxu0 0.0
        %1072 = vmatpush2.xpose.msra.mxu0 0.0
        %1073 = vmatprep.subr.mxu0 0.0
        %1074 = vmatpush2.xpose.msra.mxu0 0.0
        %1075 = vmatprep.subr.mxu0 0.0
        %1076 = vmatpush2.xpose.msra.mxu0 0.0
        %1077 = vmatprep.subr.mxu0 0.0
        %1078 = vmatpush2.xpose.msra.mxu0 0.0
        %1079 = vmatprep.mubr.f32.mxu0 0.0
        %1080 = vmatmul.mubr.f32.gmra.mxu0 %v1010
        %v1081 = vpop.f32.mrf.mxu0
        %v1082 = vadd.f32 0.0, %v1081
        %v1083 = vpop.f32.mrf.mxu0
        %1084 = vdwg.mxu0
        %v1086 = vsel %vm932, %v634, 0
        %v1089 = vsel %vm932, %v782, 0
        %1091 = vmatprep.subr.mxu0 0.0
        %1092 = vmatpush1.xpose.msra.mxu0 0.0
        %1093 = vmatprep.subr.mxu0 0.0
        %1094 = vmatpush1.xpose.msra.mxu0 0.0
        %1095 = vmatprep.subr.mxu0 0.0
        %1096 = vmatpush1.xpose.msra.mxu0 0.0
        %1097 = vmatprep.subr.mxu0 0.0
        %1098 = vmatpush1.xpose.msra.mxu0 0.0
        %1099 = vmatprep.subr.mxu0 0.0
        %1100 = vmatpush1.xpose.msra.mxu0 0.0
        %1101 = vmatprep.subr.mxu0 0.0
        %1102 = vmatpush1.xpose.msra.mxu0 0.0
        %1103 = vmatprep.subr.mxu0 0.0
        %1104 = vmatpush1.xpose.msra.mxu0 0.0
        %1105 = vmatprep.subr.mxu0 0.0
        %1106 = vmatpush1.xpose.msra.mxu0 0.0
        %1107 = vmatprep.subr.mxu0 0.0
        %1108 = vmatpush1.xpose.msra.mxu0 0.0
        %1109 = vmatprep.subr.mxu0 0.0
        %1110 = vmatpush1.xpose.msra.mxu0 0.0
        %1111 = vmatprep.subr.mxu0 0.0
        %1112 = vmatpush1.xpose.msra.mxu0 0.0
        %1113 = vmatprep.subr.mxu0 0.0
        %1114 = vmatpush1.xpose.msra.mxu0 0.0
        %1115 = vmatprep.subr.mxu0 0.0
        %1116 = vmatpush1.xpose.msra.mxu0 0.0
        %1117 = vmatprep.subr.mxu0 0.0
        %1118 = vmatpush1.xpose.msra.mxu0 0.0
        %1119 = vmatprep.subr.mxu0 0.0
        %1120 = vmatpush1.xpose.msra.mxu0 0.0
        %1121 = vmatprep.subr.mxu0 0.0
        %1122 = vmatpush1.xpose.msra.mxu0 %v1089
        %1123 = vmatprep.subr.mxu0 0.0
        %1124 = vmatpush2.xpose.msra.mxu0 0.0
        %1125 = vmatprep.subr.mxu0 0.0
        %1126 = vmatpush2.xpose.msra.mxu0 0.0
        %1127 = vmatprep.subr.mxu0 0.0
        %1128 = vmatpush2.xpose.msra.mxu0 0.0
        %1129 = vmatprep.subr.mxu0 0.0
        %1130 = vmatpush2.xpose.msra.mxu0 0.0
        %1131 = vmatprep.subr.mxu0 0.0
        %1132 = vmatpush2.xpose.msra.mxu0 0.0
        %1133 = vmatprep.subr.mxu0 0.0
        %1134 = vmatpush2.xpose.msra.mxu0 0.0
        %1135 = vmatprep.subr.mxu0 0.0
        %1136 = vmatpush2.xpose.msra.mxu0 0.0
        %1137 = vmatprep.subr.mxu0 0.0
        %1138 = vmatpush2.xpose.msra.mxu0 0.0
        %1139 = vmatprep.subr.mxu0 0.0
        %1140 = vmatpush2.xpose.msra.mxu0 0.0
        %1141 = vmatprep.subr.mxu0 0.0
        %1142 = vmatpush2.xpose.msra.mxu0 0.0
        %1143 = vmatprep.subr.mxu0 0.0
        %1144 = vmatpush2.xpose.msra.mxu0 0.0
        %1145 = vmatprep.subr.mxu0 0.0
        %1146 = vmatpush2.xpose.msra.mxu0 0.0
        %1147 = vmatprep.subr.mxu0 0.0
        %1148 = vmatpush2.xpose.msra.mxu0 0.0
        %1149 = vmatprep.subr.mxu0 0.0
        %1150 = vmatpush2.xpose.msra.mxu0 0.0
        %1151 = vmatprep.subr.mxu0 0.0
        %1152 = vmatpush2.xpose.msra.mxu0 0.0
        %1153 = vmatprep.subr.mxu0 0.0
        %1154 = vmatpush2.xpose.msra.mxu0 0.0
        %1155 = vmatprep.mubr.f32.mxu0 0.0
        %1156 = vmatmul.mubr.f32.gmra.mxu0 %v1086
        %v1157 = vpop.f32.mrf.mxu0
        %v1158 = vadd.f32 0.0, %v1157
        %v1159 = vpop.f32.mrf.mxu0
        %1160 = vdwg.mxu0
        %v1162 = vsel %vm932, %v635, 0
        %v1165 = vsel %vm932, %v783, 0
        %1167 = vmatprep.subr.mxu0 0.0
        %1168 = vmatpush1.xpose.msra.mxu0 0.0
        %1169 = vmatprep.subr.mxu0 0.0
        %1170 = vmatpush1.xpose.msra.mxu0 0.0
        %1171 = vmatprep.subr.mxu0 0.0
        %1172 = vmatpush1.xpose.msra.mxu0 0.0
        %1173 = vmatprep.subr.mxu0 0.0
        %1174 = vmatpush1.xpose.msra.mxu0 0.0
        %1175 = vmatprep.subr.mxu0 0.0
        %1176 = vmatpush1.xpose.msra.mxu0 0.0
        %1177 = vmatprep.subr.mxu0 0.0
        %1178 = vmatpush1.xpose.msra.mxu0 0.0
        %1179 = vmatprep.subr.mxu0 0.0
        %1180 = vmatpush1.xpose.msra.mxu0 0.0
        %1181 = vmatprep.subr.mxu0 0.0
        %1182 = vmatpush1.xpose.msra.mxu0 0.0
        %1183 = vmatprep.subr.mxu0 0.0
        %1184 = vmatpush1.xpose.msra.mxu0 0.0
        %1185 = vmatprep.subr.mxu0 0.0
        %1186 = vmatpush1.xpose.msra.mxu0 0.0
        %1187 = vmatprep.subr.mxu0 0.0
        %1188 = vmatpush1.xpose.msra.mxu0 0.0
        %1189 = vmatprep.subr.mxu0 0.0
        %1190 = vmatpush1.xpose.msra.mxu0 0.0
        %1191 = vmatprep.subr.mxu0 0.0
        %1192 = vmatpush1.xpose.msra.mxu0 0.0
        %1193 = vmatprep.subr.mxu0 0.0
        %1194 = vmatpush1.xpose.msra.mxu0 0.0
        %1195 = vmatprep.subr.mxu0 0.0
        %1196 = vmatpush1.xpose.msra.mxu0 0.0
        %1197 = vmatprep.subr.mxu0 0.0
        %1198 = vmatpush1.xpose.msra.mxu0 %v1165
        %1199 = vmatprep.subr.mxu0 0.0
        %1200 = vmatpush2.xpose.msra.mxu0 0.0
        %1201 = vmatprep.subr.mxu0 0.0
        %1202 = vmatpush2.xpose.msra.mxu0 0.0
        %1203 = vmatprep.subr.mxu0 0.0
        %1204 = vmatpush2.xpose.msra.mxu0 0.0
        %1205 = vmatprep.subr.mxu0 0.0
        %1206 = vmatpush2.xpose.msra.mxu0 0.0
        %1207 = vmatprep.subr.mxu0 0.0
        %1208 = vmatpush2.xpose.msra.mxu0 0.0
        %1209 = vmatprep.subr.mxu0 0.0
        %1210 = vmatpush2.xpose.msra.mxu0 0.0
        %1211 = vmatprep.subr.mxu0 0.0
        %1212 = vmatpush2.xpose.msra.mxu0 0.0
        %1213 = vmatprep.subr.mxu0 0.0
        %1214 = vmatpush2.xpose.msra.mxu0 0.0
        %1215 = vmatprep.subr.mxu0 0.0
        %1216 = vmatpush2.xpose.msra.mxu0 0.0
        %1217 = vmatprep.subr.mxu0 0.0
        %1218 = vmatpush2.xpose.msra.mxu0 0.0
        %1219 = vmatprep.subr.mxu0 0.0
        %1220 = vmatpush2.xpose.msra.mxu0 0.0
        %1221 = vmatprep.subr.mxu0 0.0
        %1222 = vmatpush2.xpose.msra.mxu0 0.0
        %1223 = vmatprep.subr.mxu0 0.0
        %1224 = vmatpush2.xpose.msra.mxu0 0.0
        %1225 = vmatprep.subr.mxu0 0.0
        %1226 = vmatpush2.xpose.msra.mxu0 0.0
        %1227 = vmatprep.subr.mxu0 0.0
        %1228 = vmatpush2.xpose.msra.mxu0 0.0
        %1229 = vmatprep.subr.mxu0 0.0
        %1230 = vmatpush2.xpose.msra.mxu0 0.0
        %1231 = vmatprep.mubr.f32.mxu0 0.0
        %1232 = vmatmul.mubr.f32.gmra.mxu0 %v1162
        %v1233 = vpop.f32.mrf.mxu0
        %v1234 = vadd.f32 0.0, %v1233
        %v1235 = vpop.f32.mrf.mxu0
        %1236 = vdwg.mxu0
        %v1237 = vmul.f32 %v1006, 0.35355338
        %v1238 = vmul.f32 %v1082, 0.35355338
        %v1239 = vmul.f32 %v1158, 0.35355338
        %v1240 = vmul.f32 %v1234, 0.35355338
        %v1241 = vsel %vm932, %v1237, -inf
        %1242 = vmax.xlane.f32.xlu0 %v1241
        %v1243 = vpop.xlane.xlu0 %1242
        %v1244 = vsel %vm932, %v1238, -inf
        %1245 = vmax.xlane.f32.xlu0 %v1244
        %v1246 = vpop.xlane.xlu0 %1245
        %v1247 = vsel %vm932, %v1239, -inf
        %1248 = vmax.xlane.f32.xlu0 %v1247
        %v1249 = vpop.xlane.xlu0 %1248
        %v1250 = vsel %vm932, %v1240, -inf
        %1251 = vmax.xlane.f32.xlu0 %v1250
        %v1252 = vpop.xlane.xlu0 %1251
        %v1253 = vsub.f32 %v1237, %v1243
        %v1254 = vsub.f32 %v1238, %v1246
        %v1255 = vsub.f32 %v1239, %v1249
        %v1256 = vsub.f32 %v1240, %v1252
        %v1257 = vmul.f32 %v1253, 1.442695
        %v1258 = vpow.pop %v1257
        %v1259 = vmul.f32 %v1254, 1.442695
        %v1260 = vpow.pop %v1259
        %v1261 = vmul.f32 %v1255, 1.442695
        %v1262 = vpow.pop %v1261
        %v1263 = vmul.f32 %v1256, 1.442695
        %v1264 = vpow.pop %v1263
        %v1265 = vsel %vm932, %v1258, 0.0
        %1266 = vadd.xlane.f32.xlu0 %v1265
        %v1267 = vpop.xlane.xlu0 %1266
        %v1268 = vsel %vm932, %v1260, 0.0
        %1269 = vadd.xlane.f32.xlu0 %v1268
        %v1270 = vpop.xlane.xlu0 %1269
        %v1271 = vsel %vm932, %v1262, 0.0
        %1272 = vadd.xlane.f32.xlu0 %v1271
        %v1273 = vpop.xlane.xlu0 %1272
        %v1274 = vsel %vm932, %v1264, 0.0
        %1275 = vadd.xlane.f32.xlu0 %v1274
        %v1276 = vpop.xlane.xlu0 %1275
        %v1277 = vrcp.pop %v1267
        %v1278 = vrcp.pop %v1270
        %v1279 = vrcp.pop %v1273
        %v1280 = vrcp.pop %v1276
        %v1281 = vmul.f32 %v1258, %v1277
        %v1282 = vmul.f32 %v1260, %v1278
        %v1283 = vmul.f32 %v1262, %v1279
        %v1284 = vmul.f32 %v1264, %v1280
        %v1286 = vsel %vm932, %v1281, 0
        %1288 = vmatprep.subr.mxu0 0.0
        %1289 = vmatpush1.msra.mxu0 0.0
        %1290 = vmatprep.subr.mxu0 0.0
        %1291 = vmatpush1.msra.mxu0 0.0
        %1292 = vmatprep.subr.mxu0 0.0
        %1293 = vmatpush1.msra.mxu0 0.0
        %1294 = vmatprep.subr.mxu0 0.0
        %1295 = vmatpush1.msra.mxu0 0.0
        %1296 = vmatprep.subr.mxu0 0.0
        %1297 = vmatpush1.msra.mxu0 0.0
        %1298 = vmatprep.subr.mxu0 0.0
        %1299 = vmatpush1.msra.mxu0 0.0
        %1300 = vmatprep.subr.mxu0 0.0
        %1301 = vmatpush1.msra.mxu0 0.0
        %1302 = vmatprep.subr.mxu0 0.0
        %1303 = vmatpush1.msra.mxu0 0.0
        %1304 = vmatprep.subr.mxu0 0.0
        %1305 = vmatpush1.msra.mxu0 0.0
        %1306 = vmatprep.subr.mxu0 0.0
        %1307 = vmatpush1.msra.mxu0 0.0
        %1308 = vmatprep.subr.mxu0 0.0
        %1309 = vmatpush1.msra.mxu0 0.0
        %1310 = vmatprep.subr.mxu0 0.0
        %1311 = vmatpush1.msra.mxu0 0.0
        %1312 = vmatprep.subr.mxu0 0.0
        %1313 = vmatpush1.msra.mxu0 0.0
        %1314 = vmatprep.subr.mxu0 0.0
        %1315 = vmatpush1.msra.mxu0 0.0
        %1316 = vmatprep.subr.mxu0 0.0
        %1317 = vmatpush1.msra.mxu0 0.0
        %1318 = vmatprep.subr.mxu0 0.0
        %1319 = vmatpush1.msra.mxu0 %v928
        %1320 = vmatprep.subr.mxu0 0.0
        %1321 = vmatpush2.msra.mxu0 0.0
        %1322 = vmatprep.subr.mxu0 0.0
        %1323 = vmatpush2.msra.mxu0 0.0
        %1324 = vmatprep.subr.mxu0 0.0
        %1325 = vmatpush2.msra.mxu0 0.0
        %1326 = vmatprep.subr.mxu0 0.0
        %1327 = vmatpush2.msra.mxu0 0.0
        %1328 = vmatprep.subr.mxu0 0.0
        %1329 = vmatpush2.msra.mxu0 0.0
        %1330 = vmatprep.subr.mxu0 0.0
        %1331 = vmatpush2.msra.mxu0 0.0
        %1332 = vmatprep.subr.mxu0 0.0
        %1333 = vmatpush2.msra.mxu0 0.0
        %1334 = vmatprep.subr.mxu0 0.0
        %1335 = vmatpush2.msra.mxu0 0.0
        %1336 = vmatprep.subr.mxu0 0.0
        %1337 = vmatpush2.msra.mxu0 0.0
        %1338 = vmatprep.subr.mxu0 0.0
        %1339 = vmatpush2.msra.mxu0 0.0
        %1340 = vmatprep.subr.mxu0 0.0
        %1341 = vmatpush2.msra.mxu0 0.0
        %1342 = vmatprep.subr.mxu0 0.0
        %1343 = vmatpush2.msra.mxu0 0.0
        %1344 = vmatprep.subr.mxu0 0.0
        %1345 = vmatpush2.msra.mxu0 0.0
        %1346 = vmatprep.subr.mxu0 0.0
        %1347 = vmatpush2.msra.mxu0 0.0
        %1348 = vmatprep.subr.mxu0 0.0
        %1349 = vmatpush2.msra.mxu0 0.0
        %1350 = vmatprep.subr.mxu0 0.0
        %1351 = vmatpush2.msra.mxu0 0.0
        %1352 = vmatprep.mubr.f32.mxu0 0.0
        %1353 = vmatmul.mubr.f32.gmra.mxu0 %v1286
        %v1354 = vpop.f32.mrf.mxu0
        %v1355 = vadd.f32 0.0, %v1354
        %v1356 = vpop.f32.mrf.mxu0
        %1357 = vdwg.mxu0
        %v1359 = vsel %vm932, %v1282, 0
        %1361 = vmatprep.subr.mxu0 0.0
        %1362 = vmatpush1.msra.mxu0 0.0
        %1363 = vmatprep.subr.mxu0 0.0
        %1364 = vmatpush1.msra.mxu0 0.0
        %1365 = vmatprep.subr.mxu0 0.0
        %1366 = vmatpush1.msra.mxu0 0.0
        %1367 = vmatprep.subr.mxu0 0.0
        %1368 = vmatpush1.msra.mxu0 0.0
        %1369 = vmatprep.subr.mxu0 0.0
        %1370 = vmatpush1.msra.mxu0 0.0
        %1371 = vmatprep.subr.mxu0 0.0
        %1372 = vmatpush1.msra.mxu0 0.0
        %1373 = vmatprep.subr.mxu0 0.0
        %1374 = vmatpush1.msra.mxu0 0.0
        %1375 = vmatprep.subr.mxu0 0.0
        %1376 = vmatpush1.msra.mxu0 0.0
        %1377 = vmatprep.subr.mxu0 0.0
        %1378 = vmatpush1.msra.mxu0 0.0
        %1379 = vmatprep.subr.mxu0 0.0
        %1380 = vmatpush1.msra.mxu0 0.0
        %1381 = vmatprep.subr.mxu0 0.0
        %1382 = vmatpush1.msra.mxu0 0.0
        %1383 = vmatprep.subr.mxu0 0.0
        %1384 = vmatpush1.msra.mxu0 0.0
        %1385 = vmatprep.subr.mxu0 0.0
        %1386 = vmatpush1.msra.mxu0 0.0
        %1387 = vmatprep.subr.mxu0 0.0
        %1388 = vmatpush1.msra.mxu0 0.0
        %1389 = vmatprep.subr.mxu0 0.0
        %1390 = vmatpush1.msra.mxu0 0.0
        %1391 = vmatprep.subr.mxu0 0.0
        %1392 = vmatpush1.msra.mxu0 %v929
        %1393 = vmatprep.subr.mxu0 0.0
        %1394 = vmatpush2.msra.mxu0 0.0
        %1395 = vmatprep.subr.mxu0 0.0
        %1396 = vmatpush2.msra.mxu0 0.0
        %1397 = vmatprep.subr.mxu0 0.0
        %1398 = vmatpush2.msra.mxu0 0.0
        %1399 = vmatprep.subr.mxu0 0.0
        %1400 = vmatpush2.msra.mxu0 0.0
        %1401 = vmatprep.subr.mxu0 0.0
        %1402 = vmatpush2.msra.mxu0 0.0
        %1403 = vmatprep.subr.mxu0 0.0
        %1404 = vmatpush2.msra.mxu0 0.0
        %1405 = vmatprep.subr.mxu0 0.0
        %1406 = vmatpush2.msra.mxu0 0.0
        %1407 = vmatprep.subr.mxu0 0.0
        %1408 = vmatpush2.msra.mxu0 0.0
        %1409 = vmatprep.subr.mxu0 0.0
        %1410 = vmatpush2.msra.mxu0 0.0
        %1411 = vmatprep.subr.mxu0 0.0
        %1412 = vmatpush2.msra.mxu0 0.0
        %1413 = vmatprep.subr.mxu0 0.0
        %1414 = vmatpush2.msra.mxu0 0.0
        %1415 = vmatprep.subr.mxu0 0.0
        %1416 = vmatpush2.msra.mxu0 0.0
        %1417 = vmatprep.subr.mxu0 0.0
        %1418 = vmatpush2.msra.mxu0 0.0
        %1419 = vmatprep.subr.mxu0 0.0
        %1420 = vmatpush2.msra.mxu0 0.0
        %1421 = vmatprep.subr.mxu0 0.0
        %1422 = vmatpush2.msra.mxu0 0.0
        %1423 = vmatprep.subr.mxu0 0.0
        %1424 = vmatpush2.msra.mxu0 0.0
        %1425 = vmatprep.mubr.f32.mxu0 0.0
        %1426 = vmatmul.mubr.f32.gmra.mxu0 %v1359
        %v1427 = vpop.f32.mrf.mxu0
        %v1428 = vadd.f32 0.0, %v1427
        %v1429 = vpop.f32.mrf.mxu0
        %1430 = vdwg.mxu0
        %v1432 = vsel %vm932, %v1283, 0
        %1434 = vmatprep.subr.mxu0 0.0
        %1435 = vmatpush1.msra.mxu0 0.0
        %1436 = vmatprep.subr.mxu0 0.0
        %1437 = vmatpush1.msra.mxu0 0.0
        %1438 = vmatprep.subr.mxu0 0.0
        %1439 = vmatpush1.msra.mxu0 0.0
        %1440 = vmatprep.subr.mxu0 0.0
        %1441 = vmatpush1.msra.mxu0 0.0
        %1442 = vmatprep.subr.mxu0 0.0
        %1443 = vmatpush1.msra.mxu0 0.0
        %1444 = vmatprep.subr.mxu0 0.0
        %1445 = vmatpush1.msra.mxu0 0.0
        %1446 = vmatprep.subr.mxu0 0.0
        %1447 = vmatpush1.msra.mxu0 0.0
        %1448 = vmatprep.subr.mxu0 0.0
        %1449 = vmatpush1.msra.mxu0 0.0
        %1450 = vmatprep.subr.mxu0 0.0
        %1451 = vmatpush1.msra.mxu0 0.0
        %1452 = vmatprep.subr.mxu0 0.0
        %1453 = vmatpush1.msra.mxu0 0.0
        %1454 = vmatprep.subr.mxu0 0.0
        %1455 = vmatpush1.msra.mxu0 0.0
        %1456 = vmatprep.subr.mxu0 0.0
        %1457 = vmatpush1.msra.mxu0 0.0
        %1458 = vmatprep.subr.mxu0 0.0
        %1459 = vmatpush1.msra.mxu0 0.0
        %1460 = vmatprep.subr.mxu0 0.0
        %1461 = vmatpush1.msra.mxu0 0.0
        %1462 = vmatprep.subr.mxu0 0.0
        %1463 = vmatpush1.msra.mxu0 0.0
        %1464 = vmatprep.subr.mxu0 0.0
        %1465 = vmatpush1.msra.mxu0 %v930
        %1466 = vmatprep.subr.mxu0 0.0
        %1467 = vmatpush2.msra.mxu0 0.0
        %1468 = vmatprep.subr.mxu0 0.0
        %1469 = vmatpush2.msra.mxu0 0.0
        %1470 = vmatprep.subr.mxu0 0.0
        %1471 = vmatpush2.msra.mxu0 0.0
        %1472 = vmatprep.subr.mxu0 0.0
        %1473 = vmatpush2.msra.mxu0 0.0
        %1474 = vmatprep.subr.mxu0 0.0
        %1475 = vmatpush2.msra.mxu0 0.0
        %1476 = vmatprep.subr.mxu0 0.0
        %1477 = vmatpush2.msra.mxu0 0.0
        %1478 = vmatprep.subr.mxu0 0.0
        %1479 = vmatpush2.msra.mxu0 0.0
        %1480 = vmatprep.subr.mxu0 0.0
        %1481 = vmatpush2.msra.mxu0 0.0
        %1482 = vmatprep.subr.mxu0 0.0
        %1483 = vmatpush2.msra.mxu0 0.0
        %1484 = vmatprep.subr.mxu0 0.0
        %1485 = vmatpush2.msra.mxu0 0.0
        %1486 = vmatprep.subr.mxu0 0.0
        %1487 = vmatpush2.msra.mxu0 0.0
        %1488 = vmatprep.subr.mxu0 0.0
        %1489 = vmatpush2.msra.mxu0 0.0
        %1490 = vmatprep.subr.mxu0 0.0
        %1491 = vmatpush2.msra.mxu0 0.0
        %1492 = vmatprep.subr.mxu0 0.0
        %1493 = vmatpush2.msra.mxu0 0.0
        %1494 = vmatprep.subr.mxu0 0.0
        %1495 = vmatpush2.msra.mxu0 0.0
        %1496 = vmatprep.subr.mxu0 0.0
        %1497 = vmatpush2.msra.mxu0 0.0
        %1498 = vmatprep.mubr.f32.mxu0 0.0
        %1499 = vmatmul.mubr.f32.gmra.mxu0 %v1432
        %v1500 = vpop.f32.mrf.mxu0
        %v1501 = vadd.f32 0.0, %v1500
        %v1502 = vpop.f32.mrf.mxu0
        %1503 = vdwg.mxu0
        %v1505 = vsel %vm932, %v1284, 0
        %1507 = vmatprep.subr.mxu0 0.0
        %1508 = vmatpush1.msra.mxu0 0.0
        %1509 = vmatprep.subr.mxu0 0.0
        %1510 = vmatpush1.msra.mxu0 0.0
        %1511 = vmatprep.subr.mxu0 0.0
        %1512 = vmatpush1.msra.mxu0 0.0
        %1513 = vmatprep.subr.mxu0 0.0
        %1514 = vmatpush1.msra.mxu0 0.0
        %1515 = vmatprep.subr.mxu0 0.0
        %1516 = vmatpush1.msra.mxu0 0.0
        %1517 = vmatprep.subr.mxu0 0.0
        %1518 = vmatpush1.msra.mxu0 0.0
        %1519 = vmatprep.subr.mxu0 0.0
        %1520 = vmatpush1.msra.mxu0 0.0
        %1521 = vmatprep.subr.mxu0 0.0
        %1522 = vmatpush1.msra.mxu0 0.0
        %1523 = vmatprep.subr.mxu0 0.0
        %1524 = vmatpush1.msra.mxu0 0.0
        %1525 = vmatprep.subr.mxu0 0.0
        %1526 = vmatpush1.msra.mxu0 0.0
        %1527 = vmatprep.subr.mxu0 0.0
        %1528 = vmatpush1.msra.mxu0 0.0
        %1529 = vmatprep.subr.mxu0 0.0
        %1530 = vmatpush1.msra.mxu0 0.0
        %1531 = vmatprep.subr.mxu0 0.0
        %1532 = vmatpush1.msra.mxu0 0.0
        %1533 = vmatprep.subr.mxu0 0.0
        %1534 = vmatpush1.msra.mxu0 0.0
        %1535 = vmatprep.subr.mxu0 0.0
        %1536 = vmatpush1.msra.mxu0 0.0
        %1537 = vmatprep.subr.mxu0 0.0
        %1538 = vmatpush1.msra.mxu0 %v931
        %1539 = vmatprep.subr.mxu0 0.0
        %1540 = vmatpush2.msra.mxu0 0.0
        %1541 = vmatprep.subr.mxu0 0.0
        %1542 = vmatpush2.msra.mxu0 0.0
        %1543 = vmatprep.subr.mxu0 0.0
        %1544 = vmatpush2.msra.mxu0 0.0
        %1545 = vmatprep.subr.mxu0 0.0
        %1546 = vmatpush2.msra.mxu0 0.0
        %1547 = vmatprep.subr.mxu0 0.0
        %1548 = vmatpush2.msra.mxu0 0.0
        %1549 = vmatprep.subr.mxu0 0.0
        %1550 = vmatpush2.msra.mxu0 0.0
        %1551 = vmatprep.subr.mxu0 0.0
        %1552 = vmatpush2.msra.mxu0 0.0
        %1553 = vmatprep.subr.mxu0 0.0
        %1554 = vmatpush2.msra.mxu0 0.0
        %1555 = vmatprep.subr.mxu0 0.0
        %1556 = vmatpush2.msra.mxu0 0.0
        %1557 = vmatprep.subr.mxu0 0.0
        %1558 = vmatpush2.msra.mxu0 0.0
        %1559 = vmatprep.subr.mxu0 0.0
        %1560 = vmatpush2.msra.mxu0 0.0
        %1561 = vmatprep.subr.mxu0 0.0
        %1562 = vmatpush2.msra.mxu0 0.0
        %1563 = vmatprep.subr.mxu0 0.0
        %1564 = vmatpush2.msra.mxu0 0.0
        %1565 = vmatprep.subr.mxu0 0.0
        %1566 = vmatpush2.msra.mxu0 0.0
        %1567 = vmatprep.subr.mxu0 0.0
        %1568 = vmatpush2.msra.mxu0 0.0
        %1569 = vmatprep.subr.mxu0 0.0
        %1570 = vmatpush2.msra.mxu0 0.0
        %1571 = vmatprep.mubr.f32.mxu0 0.0
        %1572 = vmatmul.mubr.f32.gmra.mxu0 %v1505
        %v1573 = vpop.f32.mrf.mxu0
        %v1574 = vadd.f32 0.0, %v1573
        %v1575 = vpop.f32.mrf.mxu0
        %1576 = vdwg.mxu0
        %v1577 = vcombine.low %v1355, %v1501
        %v1578 = vcombine.high %v1355, %v1501
        %v1580 = vunpack.c.l.s4 1983009808
        %v1581 = vunpack.c.0.s8 %v1580
        %v1582 = vlaneseq
        %v1583 = vshrl.u32 %v1582, 7
        %v1584 = vsub.s32 %v1581, %v1583
        %v1585 = vrot.slane %v1577, %v1584
        %v1587 = vunpack.c.l.s4 1983009808
        %v1588 = vunpack.c.0.s8 %v1587
        %v1589 = vlaneseq
        %v1590 = vshrl.u32 %v1589, 7
        %v1591 = vsub.s32 %v1588, %v1590
        %v1592 = vrot.slane %v1578, %v1591
        %v1593 = vcombine.low %v1428, %v1574
        %v1594 = vcombine.high %v1428, %v1574
        %v1596 = vunpack.c.l.s4 1983009808
        %v1597 = vunpack.c.0.s8 %v1596
        %v1598 = vlaneseq
        %v1599 = vshrl.u32 %v1598, 7
        %v1600 = vsub.s32 %v1597, %v1599
        %v1601 = vrot.slane %v1593, %v1600
        %v1603 = vunpack.c.l.s4 1983009808
        %v1604 = vunpack.c.0.s8 %v1603
        %v1605 = vlaneseq
        %v1606 = vshrl.u32 %v1605, 7
        %v1607 = vsub.s32 %v1604, %v1606
        %v1608 = vrot.slane %v1594, %v1607
        %v1609 = vcombine.low %v1585, %v1601
        %v1610 = vcombine.high %v1585, %v1601
        %v1612 = vunpack.c.l.s4 1934713408
        %v1613 = vunpack.c.0.s8 %v1612
        %v1614 = vlaneseq
        %v1615 = vshrl.u32 %v1614, 7
        %v1616 = vsub.s32 %v1613, %v1615
        %v1617 = vrot.slane %v1609, %v1616
        %v1619 = vunpack.c.l.s4 1934713408
        %v1620 = vunpack.c.0.s8 %v1619
        %v1621 = vlaneseq
        %v1622 = vshrl.u32 %v1621, 7
        %v1623 = vsub.s32 %v1620, %v1622
        %v1624 = vrot.slane %v1610, %v1623
        %v1625 = vcombine.low %v1592, %v1608
        %v1626 = vcombine.high %v1592, %v1608
        %v1628 = vunpack.c.l.s4 1934713408
        %v1629 = vunpack.c.0.s8 %v1628
        %v1630 = vlaneseq
        %v1631 = vshrl.u32 %v1630, 7
        %v1632 = vsub.s32 %v1629, %v1631
        %v1633 = vrot.slane %v1625, %v1632
        %v1635 = vunpack.c.l.s4 1934713408
        %v1636 = vunpack.c.0.s8 %v1635
        %v1637 = vlaneseq
        %v1638 = vshrl.u32 %v1637, 7
        %v1639 = vsub.s32 %v1636, %v1638
        %v1640 = vrot.slane %v1626, %v1639
        %v1641 = vcombine.high %v1617, 0.0
        %v1642 = vcombine.high %v1624, 0.0
        %v1643 = vcombine.high %v1633, 0.0
        %v1644 = vcombine.high %v1640, 0.0
        %v1645 = vcombine.low %v1617, %v1624
        %v1647 = vunpack.c.l.s4 1983009808
        %v1648 = vunpack.c.0.s8 %v1647
        %v1649 = vlaneseq
        %v1650 = vshrl.u32 %v1649, 7
        %v1651 = vsub.s32 %v1648, %v1650
        %v1652 = vrot.slane %v1645, %v1651
        %v1653 = vcombine.low %v1641, %v1642
        %v1655 = vunpack.c.l.s4 1983009808
        %v1656 = vunpack.c.0.s8 %v1655
        %v1657 = vlaneseq
        %v1658 = vshrl.u32 %v1657, 7
        %v1659 = vsub.s32 %v1656, %v1658
        %v1660 = vrot.slane %v1653, %v1659
        %v1661 = vcombine.low %v1633, %v1640
        %v1663 = vunpack.c.l.s4 1983009808
        %v1664 = vunpack.c.0.s8 %v1663
        %v1665 = vlaneseq
        %v1666 = vshrl.u32 %v1665, 7
        %v1667 = vsub.s32 %v1664, %v1666
        %v1668 = vrot.slane %v1661, %v1667
        %v1669 = vcombine.low %v1643, %v1644
        %v1671 = vunpack.c.l.s4 1983009808
        %v1672 = vunpack.c.0.s8 %v1671
        %v1673 = vlaneseq
        %v1674 = vshrl.u32 %v1673, 7
        %v1675 = vsub.s32 %v1672, %v1674
        %v1676 = vrot.slane %v1669, %v1675
        %v1677 = vcombine.low %v1652, %v1660
        %v1678 = vcombine.high %v1652, %v1660
        %v1680 = vunpack.c.l.s4 1934713408
        %v1681 = vunpack.c.0.s8 %v1680
        %v1682 = vlaneseq
        %v1683 = vshrl.u32 %v1682, 7
        %v1684 = vsub.s32 %v1681, %v1683
        %v1685 = vrot.slane %v1677, %v1684
        %v1687 = vunpack.c.l.s4 1934713408
        %v1688 = vunpack.c.0.s8 %v1687
        %v1689 = vlaneseq
        %v1690 = vshrl.u32 %v1689, 7
        %v1691 = vsub.s32 %v1688, %v1690
        %v1692 = vrot.slane %v1678, %v1691
        %v1693 = vcombine.low %v1668, %v1676
        %v1694 = vcombine.high %v1668, %v1676
        %v1696 = vunpack.c.l.s4 1934713408
        %v1697 = vunpack.c.0.s8 %v1696
        %v1698 = vlaneseq
        %v1699 = vshrl.u32 %v1698, 7
        %v1700 = vsub.s32 %v1697, %v1699
        %v1701 = vrot.slane %v1693, %v1700
        %v1703 = vunpack.c.l.s4 1934713408
        %v1704 = vunpack.c.0.s8 %v1703
        %v1705 = vlaneseq
        %v1706 = vshrl.u32 %v1705, 7
        %v1707 = vsub.s32 %v1704, %v1706
        %v1708 = vrot.slane %v1694, %v1707
        %v1709 = vcombine.low %v1685, %v1701
        %v1710 = vcombine.high %v1685, %v1701
        %v1711 = vcombine.low %v1692, %v1708
        %v1712 = vcombine.high %v1692, %v1708
        %1714 = vrot.lane.b32.xlu0 %v1710, 8
        %v1715 = vpop.permute.xlu0 %1714
        %1718 = vrot.lane.b32.xlu0 %v1711, 16
        %v1719 = vpop.permute.xlu0 %1718
        %1722 = vrot.lane.b32.xlu0 %v1712, 24
        %v1723 = vpop.permute.xlu0 %1722
        %v1725 = vsel %vm932, %v1709, %v1715
        %vm1726 = vcmask 130048
        %v1727 = vsel %vm1726, %v1725, %v1719
        %vm1728 = vcmask 195584
        %v1729 = vsel %vm1728, %v1727, %v1723
        %v1730 = vld [vmem:[%s4] sm:$0xff]
        %v1731 = vld [vmem:[%s4 + $0x8] sm:$0xff]
        %v1732 = vld [vmem:[%s4 + $0x10] sm:$0xff]
        %v1733 = vld [vmem:[%s4 + $0x18] sm:$0xff]
        %v1734 = vlaneseq
        %v1735 = vshrl.u32 %v1734, 7
        %v1736 = vsub.s32 0, %v1735
        %v1737 = vrot.slane %v409, %v1736
        %v1739 = vsel %vm416, %v1729, 0
        %1741 = vmatprep.subr.mxu0 0.0
        %1742 = vmatpush1.msra.mxu0 0.0
        %1743 = vmatprep.subr.mxu0 0.0
        %1744 = vmatpush1.msra.mxu0 0.0
        %1745 = vmatprep.subr.mxu0 0.0
        %1746 = vmatpush1.msra.mxu0 0.0
        %1747 = vmatprep.subr.mxu0 0.0
        %1748 = vmatpush1.msra.mxu0 0.0
        %1749 = vmatprep.subr.mxu0 0.0
        %1750 = vmatpush1.msra.mxu0 0.0
        %1751 = vmatprep.subr.mxu0 0.0
        %1752 = vmatpush1.msra.mxu0 0.0
        %1753 = vmatprep.subr.mxu0 0.0
        %1754 = vmatpush1.msra.mxu0 0.0
        %1755 = vmatprep.subr.mxu0 0.0
        %1756 = vmatpush1.msra.mxu0 0.0
        %1757 = vmatprep.subr.mxu0 0.0
        %1758 = vmatpush1.msra.mxu0 0.0
        %1759 = vmatprep.subr.mxu0 0.0
        %1760 = vmatpush1.msra.mxu0 0.0
        %1761 = vmatprep.subr.mxu0 0.0
        %1762 = vmatpush1.msra.mxu0 0.0
        %1763 = vmatprep.subr.mxu0 0.0
        %1764 = vmatpush1.msra.mxu0 0.0
        %1765 = vmatprep.subr.mxu0 0.0
        %1766 = vmatpush1.msra.mxu0 %v1733
        %1767 = vmatprep.subr.mxu0 0.0
        %1768 = vmatpush1.msra.mxu0 %v1732
        %1769 = vmatprep.subr.mxu0 0.0
        %1770 = vmatpush1.msra.mxu0 %v1731
        %1771 = vmatprep.subr.mxu0 0.0
        %1772 = vmatpush1.msra.mxu0 %v1730
        %1773 = vmatprep.subr.mxu0 0.0
        %1774 = vmatpush2.msra.mxu0 0.0
        %1775 = vmatprep.subr.mxu0 0.0
        %1776 = vmatpush2.msra.mxu0 0.0
        %1777 = vmatprep.subr.mxu0 0.0
        %1778 = vmatpush2.msra.mxu0 0.0
        %1779 = vmatprep.subr.mxu0 0.0
        %1780 = vmatpush2.msra.mxu0 0.0
        %1781 = vmatprep.subr.mxu0 0.0
        %1782 = vmatpush2.msra.mxu0 0.0
        %1783 = vmatprep.subr.mxu0 0.0
        %1784 = vmatpush2.msra.mxu0 0.0
        %1785 = vmatprep.subr.mxu0 0.0
        %1786 = vmatpush2.msra.mxu0 0.0
        %1787 = vmatprep.subr.mxu0 0.0
        %1788 = vmatpush2.msra.mxu0 0.0
        %1789 = vmatprep.subr.mxu0 0.0
        %1790 = vmatpush2.msra.mxu0 0.0
        %1791 = vmatprep.subr.mxu0 0.0
        %1792 = vmatpush2.msra.mxu0 0.0
        %1793 = vmatprep.subr.mxu0 0.0
        %1794 = vmatpush2.msra.mxu0 0.0
        %1795 = vmatprep.subr.mxu0 0.0
        %1796 = vmatpush2.msra.mxu0 0.0
        %1797 = vmatprep.subr.mxu0 0.0
        %1798 = vmatpush2.msra.mxu0 0.0
        %1799 = vmatprep.subr.mxu0 0.0
        %1800 = vmatpush2.msra.mxu0 0.0
        %1801 = vmatprep.subr.mxu0 0.0
        %1802 = vmatpush2.msra.mxu0 0.0
        %1803 = vmatprep.subr.mxu0 0.0
        %1804 = vmatpush2.msra.mxu0 0.0
        %1805 = vmatprep.mubr.f32.mxu0 0.0
        %1806 = vmatmul.mubr.f32.gmra.mxu0 %v1739
        %v1807 = vpop.f32.mrf.mxu0
        %v1808 = vadd.f32 %v1737, %v1807
        %v1809 = vpop.f32.mrf.mxu0
        %1810 = vdwg.mxu0
        %v1811 = vadd.f32 %v402, %v1808
        %v1812 = vsel %vm416, %v1811, 0.0
        %1813 = vadd.xlane.f32.xlu0 %v1812
        %v1814 = vpop.xlane.xlu0 %1813
        %v1815 = vrcp.pop 32.0
        %v1816 = vmul.f32 %v1814, %v1815
        %v1817 = vsub.f32 %v1811, %v1816
        %v1818 = vmul.f32 %v1817, %v1817
        %v1819 = vsel %vm416, %v1818, 0.0
        %1820 = vadd.xlane.f32.xlu0 %v1819
        %v1821 = vpop.xlane.xlu0 %1820
        %v1822 = vmul.f32 %v1821, %v1815
        %v1823 = vadd.f32 %v1822, 1e-05
        %v1824 = vrsqrt.pop %v1823
        %v1825 = vmul.f32 %v1817, %v1824
        %v1826 = vlaneseq
        %v1827 = vshrl.u32 %v1826, 7
        %v1828 = vsub.s32 1, %v1827
        %v1829 = vrot.slane %v409, %v1828
        %v1830 = vmul.f32 %v1825, %v1829
        %v1831 = vlaneseq
        %v1832 = vshrl.u32 %v1831, 7
        %v1833 = vsub.s32 2, %v1832
        %v1834 = vrot.slane %v409, %v1833
        %v1835 = vadd.f32 %v1830, %v1834
        %v1836 = vld [vmem:[%s5] sm:$0xff]
        %v1837 = vld [vmem:[%s5 + $0x8] sm:$0xff]
        %v1838 = vld [vmem:[%s5 + $0x10] sm:$0xff]
        %v1839 = vld [vmem:[%s5 + $0x18] sm:$0xff]
        %v1840 = vld [vmem:[%s6] sm:$0x1]
        %v1842 = vlaneseq
        %v1843 = vshrl.u32 %v1842, 7
        %v1844 = vsub.s32 0, %v1843
        %v1845 = vrot.slane %v1840, %v1844
        %v1848 = vsel %vm416, %v1835, 0
        %1850 = vmatprep.subr.mxu0 0.0
        %1851 = vmatpush1.msra.mxu0 0.0
        %1852 = vmatprep.subr.mxu0 0.0
        %1853 = vmatpush1.msra.mxu0 0.0
        %1854 = vmatprep.subr.mxu0 0.0
        %1855 = vmatpush1.msra.mxu0 0.0
        %1856 = vmatprep.subr.mxu0 0.0
        %1857 = vmatpush1.msra.mxu0 0.0
        %1858 = vmatprep.subr.mxu0 0.0
        %1859 = vmatpush1.msra.mxu0 0.0
        %1860 = vmatprep.subr.mxu0 0.0
        %1861 = vmatpush1.msra.mxu0 0.0
        %1862 = vmatprep.subr.mxu0 0.0
        %1863 = vmatpush1.msra.mxu0 0.0
        %1864 = vmatprep.subr.mxu0 0.0
        %1865 = vmatpush1.msra.mxu0 0.0
        %1866 = vmatprep.subr.mxu0 0.0
        %1867 = vmatpush1.msra.mxu0 0.0
        %1868 = vmatprep.subr.mxu0 0.0
        %1869 = vmatpush1.msra.mxu0 0.0
        %1870 = vmatprep.subr.mxu0 0.0
        %1871 = vmatpush1.msra.mxu0 0.0
        %1872 = vmatprep.subr.mxu0 0.0
        %1873 = vmatpush1.msra.mxu0 0.0
        %1874 = vmatprep.subr.mxu0 0.0
        %1875 = vmatpush1.msra.mxu0 %v1839
        %1876 = vmatprep.subr.mxu0 0.0
        %1877 = vmatpush1.msra.mxu0 %v1838
        %1878 = vmatprep.subr.mxu0 0.0
        %1879 = vmatpush1.msra.mxu0 %v1837
        %1880 = vmatprep.subr.mxu0 0.0
        %1881 = vmatpush1.msra.mxu0 %v1836
        %1882 = vmatprep.subr.mxu0 0.0
        %1883 = vmatpush2.msra.mxu0 0.0
        %1884 = vmatprep.subr.mxu0 0.0
        %1885 = vmatpush2.msra.mxu0 0.0
        %1886 = vmatprep.subr.mxu0 0.0
        %1887 = vmatpush2.msra.mxu0 0.0
        %1888 = vmatprep.subr.mxu0 0.0
        %1889 = vmatpush2.msra.mxu0 0.0
        %1890 = vmatprep.subr.mxu0 0.0
        %1891 = vmatpush2.msra.mxu0 0.0
        %1892 = vmatprep.subr.mxu0 0.0
        %1893 = vmatpush2.msra.mxu0 0.0
        %1894 = vmatprep.subr.mxu0 0.0
        %1895 = vmatpush2.msra.mxu0 0.0
        %1896 = vmatprep.subr.mxu0 0.0
        %1897 = vmatpush2.msra.mxu0 0.0
        %1898 = vmatprep.subr.mxu0 0.0
        %1899 = vmatpush2.msra.mxu0 0.0
        %1900 = vmatprep.subr.mxu0 0.0
        %1901 = vmatpush2.msra.mxu0 0.0
        %1902 = vmatprep.subr.mxu0 0.0
        %1903 = vmatpush2.msra.mxu0 0.0
        %1904 = vmatprep.subr.mxu0 0.0
        %1905 = vmatpush2.msra.mxu0 0.0
        %1906 = vmatprep.subr.mxu0 0.0
        %1907 = vmatpush2.msra.mxu0 0.0
        %1908 = vmatprep.subr.mxu0 0.0
        %1909 = vmatpush2.msra.mxu0 0.0
        %1910 = vmatprep.subr.mxu0 0.0
        %1911 = vmatpush2.msra.mxu0 0.0
        %1912 = vmatprep.subr.mxu0 0.0
        %1913 = vmatpush2.msra.mxu0 0.0
        %1914 = vmatprep.mubr.f32.mxu0 0.0
        %1915 = vmatmul.mubr.f32.gmra.mxu0 %v1848
        %v1916 = vpop.f32.mrf.mxu0
        %v1917 = vadd.f32 %v1845, %v1916
        %v1918 = vpop.f32.mrf.mxu0
        %1919 = vdwg.mxu0
        %v1920 = vmul.f32 %v1917, 0.5
        %v1921 = vmul.f32 %v1917, 0.70710677
        %v1922 = verf.f32.pop %v1921
        %v1923 = vadd.f32 %v1922, 1.0
        %v1924 = vmul.f32 %v1920, %v1923
        %v1925 = vld [vmem:[%s7] sm:$0xff]
        %v1926 = vld [vmem:[%s7 + $0x8] sm:$0xff]
        %v1927 = vld [vmem:[%s7 + $0x10] sm:$0xff]
        %v1928 = vld [vmem:[%s7 + $0x18] sm:$0xff]
        %v1929 = vld [vmem:[%s7 + $0x20] sm:$0xff]
        %v1930 = vld [vmem:[%s7 + $0x28] sm:$0xff]
        %v1931 = vld [vmem:[%s7 + $0x30] sm:$0xff]
        %v1932 = vld [vmem:[%s7 + $0x38] sm:$0xff]
        %v1933 = vlaneseq
        %v1934 = vshrl.u32 %v1933, 7
        %v1935 = vsub.s32 3, %v1934
        %v1936 = vrot.slane %v409, %v1935
        %vm1937 = vcmask 523264
        %v1939 = vsel %vm1937, %v1924, 0
        %1941 = vmatprep.subr.mxu0 0.0
        %1942 = vmatpush1.msra.mxu0 0.0
        %1943 = vmatprep.subr.mxu0 0.0
        %1944 = vmatpush1.msra.mxu0 0.0
        %1945 = vmatprep.subr.mxu0 0.0
        %1946 = vmatpush1.msra.mxu0 0.0
        %1947 = vmatprep.subr.mxu0 0.0
        %1948 = vmatpush1.msra.mxu0 0.0
        %1949 = vmatprep.subr.mxu0 0.0
        %1950 = vmatpush1.msra.mxu0 0.0
        %1951 = vmatprep.subr.mxu0 0.0
        %1952 = vmatpush1.msra.mxu0 0.0
        %1953 = vmatprep.subr.mxu0 0.0
        %1954 = vmatpush1.msra.mxu0 0.0
        %1955 = vmatprep.subr.mxu0 0.0
        %1956 = vmatpush1.msra.mxu0 0.0
        %1957 = vmatprep.subr.mxu0 0.0
        %1958 = vmatpush1.msra.mxu0 %v1932
        %1959 = vmatprep.subr.mxu0 0.0
        %1960 = vmatpush1.msra.mxu0 %v1931
        %1961 = vmatprep.subr.mxu0 0.0
        %1962 = vmatpush1.msra.mxu0 %v1930
        %1963 = vmatprep.subr.mxu0 0.0
        %1964 = vmatpush1.msra.mxu0 %v1929
        %1965 = vmatprep.subr.mxu0 0.0
        %1966 = vmatpush1.msra.mxu0 %v1928
        %1967 = vmatprep.subr.mxu0 0.0
        %1968 = vmatpush1.msra.mxu0 %v1927
        %1969 = vmatprep.subr.mxu0 0.0
        %1970 = vmatpush1.msra.mxu0 %v1926
        %1971 = vmatprep.subr.mxu0 0.0
        %1972 = vmatpush1.msra.mxu0 %v1925
        %1973 = vmatprep.subr.mxu0 0.0
        %1974 = vmatpush2.msra.mxu0 0.0
        %1975 = vmatprep.subr.mxu0 0.0
        %1976 = vmatpush2.msra.mxu0 0.0
        %1977 = vmatprep.subr.mxu0 0.0
        %1978 = vmatpush2.msra.mxu0 0.0
        %1979 = vmatprep.subr.mxu0 0.0
        %1980 = vmatpush2.msra.mxu0 0.0
        %1981 = vmatprep.subr.mxu0 0.0
        %1982 = vmatpush2.msra.mxu0 0.0
        %1983 = vmatprep.subr.mxu0 0.0
        %1984 = vmatpush2.msra.mxu0 0.0
        %1985 = vmatprep.subr.mxu0 0.0
        %1986 = vmatpush2.msra.mxu0 0.0
        %1987 = vmatprep.subr.mxu0 0.0
        %1988 = vmatpush2.msra.mxu0 0.0
        %1989 = vmatprep.subr.mxu0 0.0
        %1990 = vmatpush2.msra.mxu0 0.0
        %1991 = vmatprep.subr.mxu0 0.0
        %1992 = vmatpush2.msra.mxu0 0.0
        %1993 = vmatprep.subr.mxu0 0.0
        %1994 = vmatpush2.msra.mxu0 0.0
        %1995 = vmatprep.subr.mxu0 0.0
        %1996 = vmatpush2.msra.mxu0 0.0
        %1997 = vmatprep.subr.mxu0 0.0
        %1998 = vmatpush2.msra.mxu0 0.0
        %1999 = vmatprep.subr.mxu0 0.0
        %2000 = vmatpush2.msra.mxu0 0.0
        %2001 = vmatprep.subr.mxu0 0.0
        %2002 = vmatpush2.msra.mxu0 0.0
        %2003 = vmatprep.subr.mxu0 0.0
        %2004 = vmatpush2.msra.mxu0 0.0
        %2005 = vmatprep.mubr.f32.mxu0 0.0
        %2006 = vmatmul.mubr.f32.gmra.mxu0 %v1939
        %v2007 = vpop.f32.mrf.mxu0
        %v2008 = vadd.f32 %v1936, %v2007
        %v2009 = vpop.f32.mrf.mxu0
        %2010 = vdwg.mxu0
        %v2011 = vadd.f32 %v1835, %v2008
        %v2012 = vsel %vm416, %v2011, 0.0
        %2013 = vadd.xlane.f32.xlu0 %v2012
        %v2014 = vpop.xlane.xlu0 %2013
        %v2015 = vmul.f32 %v2014, %v1815
        %v2016 = vsub.f32 %v2011, %v2015
        %v2017 = vmul.f32 %v2016, %v2016
        %v2018 = vsel %vm416, %v2017, 0.0
        %2019 = vadd.xlane.f32.xlu0 %v2018
        %v2020 = vpop.xlane.xlu0 %2019
        %v2021 = vmul.f32 %v2020, %v1815
        %v2022 = vadd.f32 %v2021, 1e-05
        %v2023 = vrsqrt.pop %v2022
        %v2024 = vmul.f32 %v2016, %v2023
        %v2025 = vlaneseq
        %v2026 = vshrl.u32 %v2025, 7
        %v2027 = vsub.s32 4, %v2026
        %v2028 = vrot.slane %v409, %v2027
        %v2029 = vmul.f32 %v2024, %v2028
        %v2030 = vlaneseq
        %v2031 = vshrl.u32 %v2030, 7
        %v2032 = vsub.s32 5, %v2031
        %v2033 = vrot.slane %v409, %v2032
        %v2034 = vadd.f32 %v2029, %v2033
        %2035 = vst.msk [vmem:[%s401] sm:$0xff] %vm416, %v2034
        %s2036 = sand.u32 %s252, 1
        %s2037 = scalar_lea.sflag [#allocation4], %s2036
        %s2038 = sand.u32 %s252, 1
        %s2039 = smul.addr %s2038, 8
        %s2040 = scalar_lea.vmem [#allocation7], %s2039
        // Predicated region
        $region65: #{tpu_custom_call.1} parent=55 // pred_check
          %p2041 = pneg %p262
        $region66: #{tpu_custom_call.1} parent=55 // pred_check_branch
          %2043 = sbr.rel (%p2041) target = $region68
        $region67: #{tpu_custom_call.1} parent=55 // pred_region
          %s2045 = ssub.s32 128, 128
          %2046 = vsyncadd %s2037, %s2045
          %s2047 = sadd.s32 %s34, %s33
          %s2048 = smul.addr %s2047, 128
          %s2049 = scalar_lea.hbm %s9, %s2048
          %s2051 = sshll.u32 %s2040, 4
          %s2052 = int_to_ptr.vmem [resolvable:$true] %s2051
          %2054 = dma.vmem_to_hbm [thread:$0]  %s2052, 128, %s2049, %s2037
        $region68: #{tpu_custom_call.1} parent=55 // pred_fallthru
          _
      $region56: #{tpu_custom_call.1} parent=5 // pred_fallthru
        _
      %p2055 = scmp.le.s32.totalorder 2, %s24
      // Predicated region
      $region69: #{tpu_custom_call.1} parent=5 // pred_check
        %p2056 = pneg %p2055
      $region70: #{tpu_custom_call.1} parent=5 // pred_check_branch
        %2058 = sbr.rel (%p2056) target = $region72
      $region71: #{tpu_custom_call.1} parent=5 // pred_region
        %s2059 = ssub.s32 %s24, 2
        // Predicated region
        $region73: #{tpu_custom_call.1} parent=71 // pred_check
          %p2060 = pneg %p268
        $region74: #{tpu_custom_call.1} parent=71 // pred_check_branch
          %2062 = sbr.rel (%p2060) target = $region76
        $region75: #{tpu_custom_call.1} parent=71 // pred_region
          %s2063 = sand.u32 %s253, 1
          %s2064 = scalar_lea.sflag [#allocation4], %s2063
          %s2065 = sand.u32 %s253, 1
          %s2066 = smul.addr %s2065, 8
          %s2067 = scalar_lea.vmem [#allocation7], %s2066
          %2068 = dma.done %s2064, 128
        $region76: #{tpu_custom_call.1} parent=71 // pred_fallthru
          _
      $region72: #{tpu_custom_call.1} parent=5 // pred_fallthru
        _
    $region6: #{tpu_custom_call.1} parent=1 // loop_footer
      %s28 = sadd.s32 1, %s24
    $region7: #{tpu_custom_call.1} parent=1 // loop_footer_branch
      %23 = sbr.rel target = $region3
    $region8: #{tpu_custom_call.1} parent=1 // loop_exit
      _
    %2069 = vsyncpa [#allocation3], 1
    %s2070 = scalar_lea.sflag [#allocation3], 1
    %2071 = vsyncpa %s2070, 1
    %2072 = vsyncpa [#allocation6], 1
    %s2073 = scalar_lea.sflag [#allocation6], 1
    %2074 = vsyncpa %s2073, 1
    %2075 = vsyncpa [#allocation4], 1
    %s2076 = scalar_lea.sflag [#allocation4], 1
    %2077 = vsyncpa %s2076, 1

</llo_original>
